<compile_context>
chip_gen: v7x
topology: tpu7x:2x2x1
jax: 0.10.0
libtpu: 0.0.40
codegen_flags: <defaults>
</compile_context>

<pallas_src>
import functools

import jax
import jax.numpy as jnp
from jax.experimental import pallas as pl
from jax.experimental.pallas import tpu as pltpu


LANE = 128                              # TPU lane width
VMEM_TILE_BUDGET = 16 * 1024 * 1024     # conservative tile budget (fits v7x 32 MiB scoped)
VMEM_LIMIT_BYTES = 32 * 1024 * 1024     # scoped VMEM limit: safe on v5e/v6e/v7x


def _round_up(x, m):
    return -(-x // m) * m


# ---------------------------------------------------------------------------
# Conv block hot path: fused im2col-matmul (bf16 MXU) + folded (bias + BN eval) + ReLU
# ---------------------------------------------------------------------------
def conv_bn_relu_kernel(p_ref, w_ref, scale_ref, shift_ref, o_ref):
    # bf16 x bf16 -> f32 accumulate on the MXU.
    y = jnp.dot(p_ref[...], w_ref[...], preferred_element_type=jnp.float32)
    # conv bias + BatchNorm(eval) pre-folded into scale/shift; lane-dense (128-wide) store.
    o_ref[...] = jnp.maximum(y * scale_ref[...] + shift_ref[...], 0.0)


def _pick_tile_m(m, kp, cp):
    """VMEM-budget-aware row tile; guarantees >=2 grid steps when m is large enough."""
    per_row = 2 * (kp * 2) + 2 * (cp * 4)          # double-buffered bf16 LHS + f32 out
    fixed = kp * cp * 2 + 4 * cp * 4                # weight slab + scale/shift (approx)
    budget_rows = max(8, (VMEM_TILE_BUDGET - fixed) // per_row)
    tile = min(m, 1024, budget_rows)
    if m > 16:
        tile = min(tile, -(-m // 2))                # >=2 steps -> both v7x TCs get work
    return max(8, (tile // 8) * 8)


def conv_bn_relu(patches, w_pad, scale_pad, shift_pad):
    m, kp = patches.shape
    cp = w_pad.shape[1]                             # padded Cout (multiple of 128)
    tile_m = _pick_tile_m(m, kp, cp)
    m_pad = _round_up(m, tile_m)                    # pad rows instead of awkward divisors
    if m_pad != m:
        patches = jnp.pad(patches, ((0, m_pad - m), (0, 0)))
    y = pl.pallas_call(
        conv_bn_relu_kernel,
        out_shape=jax.ShapeDtypeStruct((m_pad, cp), jnp.float32),
        grid=(m_pad // tile_m,),
        in_specs=[
            pl.BlockSpec((tile_m, kp), lambda i: (i, 0)),
            pl.BlockSpec((kp, cp), lambda i: (0, 0)),
            pl.BlockSpec((1, cp), lambda i: (0, 0)),
            pl.BlockSpec((1, cp), lambda i: (0, 0)),
        ],
        out_specs=pl.BlockSpec((tile_m, cp), lambda i: (i, 0)),
        compiler_params=pltpu.CompilerParams(
            dimension_semantics=("parallel",),
            vmem_limit_bytes=VMEM_LIMIT_BYTES,
        ),
    )(patches, w_pad, scale_pad, shift_pad)
    return y[:m] if m_pad != m else y


def im2col_nhwc(x, k, kp):
    """x: (B, H, W, C) NHWC, 'same' padding -> bf16 (B*H*W, kp) with K padded to kp.

    Rows ordered (B, H, W); columns ordered (kh, kw, C) to match the packed weight."""
    b, h, w, c = x.shape
    pad = k // 2                                    # odd kernels only (matches 'same')
    xp = jnp.pad(x, ((0, 0), (pad, pad), (pad, pad), (0, 0)))
    cols = [xp[:, di:di + h, dj:dj + w, :] for di in range(k) for dj in range(k)]
    p = jnp.concatenate(cols, axis=-1).reshape(b * h * w, k * k * c)
    p = jnp.pad(p, ((0, 0), (0, kp - k * k * c)))   # lane-dense contraction dim
    return p.astype(jnp.bfloat16)


def conv_block_apply(x_nhwc, packed, *, cout, kernel_size, pool_size):
    b, h, w, _ = x_nhwc.shape
    ph, pw = pool_size
    assert kernel_size % 2 == 1, "even kernels need asymmetric 'same' padding"
    assert h % ph == 0 and w % pw == 0, \
        "TODO(synk): PyTorch AvgPool2d drops the remainder; exact multiples required here"
    kp = packed["w_pad"].shape[0]
    patches = im2col_nhwc(x_nhwc, kernel_size, kp)                 # (B*H*W, Kp) bf16
    y = conv_bn_relu(patches, packed["w_pad"], packed["scale_pad"], packed["shift_pad"])
    cp = packed["w_pad"].shape[1]
    # pool_type='avg': AvgPool2d(pool_size) on the NHWC slab (jitted XLA glue).
    y = y.reshape(b, h // ph, ph, w // pw, pw, cp).mean(axis=(2, 4))
    # Dropout: eval mode => identity.
    return y[..., :cout]                                           # drop channel lane-pad


# ---------------------------------------------------------------------------
# Bidirectional GRU + time-mean, one kernel, grid=(2,) "parallel" over direction.
#   - input projection + input bias for all T steps hoisted into one bf16 matmul
#   - gates lane-aligned: 128 lanes per gate -> every slice in the loop is vreg-aligned
#   - r and z computed with a single sigmoid over contiguous lanes
#   - per-direction time-mean emitted directly (== torch.mean(gru_out, dim=1))
# ---------------------------------------------------------------------------
def gru_dir_kernel(x_ref, wi_ref, bi_ref, whh_ref, bh_ref, o_ref, *, T, B, GATE):
    x = x_ref[0]                              # (T*B, Cp)  bf16, this direction's inputs
    wi = wi_ref[0]                            # (Cp, 3*GATE) bf16
    whh = whh_ref[0]                          # (GATE, 3*GATE) bf16
    bi = bi_ref[0]                            # (1, 3*GATE) f32: b_ih (+ b_hr/b_hz folded)
    bh = bh_ref[0]                            # (1, 3*GATE) f32: b_hn only (stays inside r*)
    # Hoisted input projection + input bias for all T steps and all three gates.
    proj = jnp.dot(x, wi, preferred_element_type=jnp.float32) + bi            # (T*B, 3*GATE)
    h = jnp.zeros((B, GATE), jnp.float32)     # hidden in lanes 0:H, padded lanes stay 0
    acc = jnp.zeros((B, GATE), jnp.float32)
    for t in range(T):                        # static unroll; T is small here
        # TODO(synk): switch to lax.fori_loop(unroll=2-4) once T grows past a few dozen.
        xg = proj[t * B:(t + 1) * B, :]
        hg = jnp.dot(h.astype(jnp.bfloat16), whh, preferred_element_type=jnp.float32) + bh
        rz = jax.nn.sigmoid(xg[:, :2 * GATE] + hg[:, :2 * GATE])   # r|z: one EUP pass
        r = rz[:, :GATE]
        z = rz[:, GATE:]
        n = jnp.tanh(xg[:, 2 * GATE:] + r * hg[:, 2 * GATE:])
        h = (1.0 - z) * n + z * h
        acc = acc + h
    o_ref[0] = acc * (1.0 / T)                # per-direction time-mean of hidden states


def bigru_mean(x_btc, gp, hidden):
    """x_btc: (B, T, C) f32.  Returns (B, 2*hidden) = time-mean of biGRU outputs."""
    B, T, C = x_btc.shape
    Cp = gp["wi"].shape[1]
    GATE = gp["whh"].shape[1]
    GP = gp["whh"].shape[2]
    xtb = jnp.transpose(x_btc, (1, 0, 2))                          # (T, B, C), rows (t, b)
    x_dir = jnp.stack([xtb.reshape(T * B, C),                      # dir 0: forward order
                       xtb[::-1].reshape(T * B, C)], axis=0)       # dir 1: time-reversed
    x_dir = jnp.pad(x_dir, ((0, 0), (0, 0), (0, Cp - C))).astype(jnp.bfloat16)
    kernel = functools.partial(gru_dir_kernel, T=T, B=B, GATE=GATE)
    out = pl.pallas_call(
        kernel,
        out_shape=jax.ShapeDtypeStruct((2, B, GATE), jnp.float32),
        grid=(2,),
        in_specs=[
            pl.BlockSpec((1, T * B, Cp), lambda d: (d, 0, 0)),
            pl.BlockSpec((1, Cp, GP), lambda d: (d, 0, 0)),
            pl.BlockSpec((1, 1, GP), lambda d: (d, 0, 0)),
            pl.BlockSpec((1, GATE, GP), lambda d: (d, 0, 0)),
            pl.BlockSpec((1, 1, GP), lambda d: (d, 0, 0)),
        ],
        out_specs=pl.BlockSpec((1, B, GATE), lambda d: (d, 0, 0)),
        compiler_params=pltpu.CompilerParams(
            dimension_semantics=("parallel",),          # fwd/bwd on separate TCs on v7x
            vmem_limit_bytes=VMEM_LIMIT_BYTES,
        ),
    )(x_dir, gp["wi"], gp["bi"], gp["whh"], gp["bh"])
    # torch bidirectional output = concat(fwd, bwd) features; time-mean == this concat.
    return jnp.concatenate([out[0, :, :hidden], out[1, :, :hidden]], axis=-1)


# ---------------------------------------------------------------------------
# Whole forward pass (conv blocks -> freq mean -> biGRU -> time mean), jitted.
# ---------------------------------------------------------------------------
@functools.partial(jax.jit, static_argnames=("kernel_size", "pool_size", "conv_channels"))
def feature_extraction_forward(x_nchw, params, *, kernel_size, pool_size, conv_channels):
    x = jnp.transpose(x_nchw, (0, 2, 3, 1))                 # NCHW -> NHWC, once
    for blk, cout in zip(params["conv_blocks"], conv_channels):
        x = conv_block_apply(x, blk, cout=cout, kernel_size=kernel_size,
                             pool_size=pool_size)
    x = jnp.mean(x, axis=2)                                 # torch.mean(x, dim=3) -> (B, T, C)
    hidden = conv_channels[-1] // 2                         # GRU hidden = max_filters // 2
    return bigru_mean(x, params["gru"], hidden)             # (B, max_filters)


# ---------------------------------------------------------------------------
# Deterministic synthetic parameter construction + packing for the kernels
# ---------------------------------------------------------------------------
def make_conv_block_params(key, cin, cout, k):
    ks = jax.random.split(key, 4)
    return dict(
        w=jax.random.normal(ks[0], (cout, cin, k, k), jnp.float32) * 0.1,  # torch Conv2d weight
        b=jax.random.normal(ks[1], (cout,), jnp.float32) * 0.1,
        gamma=1.0 + 0.05 * jax.random.normal(ks[2], (cout,), jnp.float32),
        beta=0.05 * jax.random.normal(ks[3], (cout,), jnp.float32),
        mean=jnp.zeros((cout,), jnp.float32),               # BN running stats (eval mode)
        var=jnp.ones((cout,), jnp.float32),
    )


def pack_conv_block_params(p, k, eps=1e-5):
    cout, cin = p["w"].shape[0], p["w"].shape[1]
    cp = _round_up(cout, LANE)                              # Cout padded to 128 lanes
    kdim = k * k * cin
    kp = _round_up(kdim, LANE)                              # contraction dim padded to 128
    # (Cout, Cin, kh, kw) -> (kh*kw*Cin, Cout); rows ordered (kh, kw, Cin) = im2col columns.
    w2d = jnp.transpose(p["w"], (2, 3, 1, 0)).reshape(kdim, cout)
    scale = p["gamma"] / jnp.sqrt(p["var"] + eps)           # general BN(eval) fold
    shift = p["beta"] - p["mean"] * scale + p["b"] * scale  # conv bias folded into shift
    return dict(
        w_pad=jnp.pad(w2d, ((0, kp - kdim), (0, cp - cout))).astype(jnp.bfloat16),
        scale_pad=jnp.pad(scale, (0, cp - cout)).reshape(1, cp),
        shift_pad=jnp.pad(shift, (0, cp - cout)).reshape(1, cp),
    )


def make_gru_params(key, C, H, scale=0.1):
    """Bidirectional torch.nn.GRU parameters, packed with lane-aligned (128-wide) gates."""
    assert H <= LANE, "TODO(synk): for H > 128 make H a multiple of 128 and pack gates densely"
    GATE = LANE
    GP = 3 * GATE
    Cp = _round_up(C, LANE)
    ks = jax.random.split(key, 8)

    def one_dir(k4):
        w_ih = jax.random.normal(k4[0], (3 * H, C), jnp.float32) * scale   # [Wir; Wiz; Win]
        w_hh = jax.random.normal(k4[1], (3 * H, H), jnp.float32) * scale   # [Whr; Whz; Whn]
        b_ih = jax.random.normal(k4[2], (3 * H,), jnp.float32) * scale
        b_hh = jax.random.normal(k4[3], (3 * H,), jnp.float32) * scale
        wi = jnp.zeros((Cp, GP), jnp.float32)
        whh = jnp.zeros((GATE, GP), jnp.float32)
        bi = jnp.zeros((GP,), jnp.float32)
        bh = jnp.zeros((GP,), jnp.float32)
        for g in range(3):                                  # r, z, n -> lane-aligned blocks
            wi = wi.at[:C, g * GATE:g * GATE + H].set(w_ih[g * H:(g + 1) * H, :].T)
            whh = whh.at[:H, g * GATE:g * GATE + H].set(w_hh[g * H:(g + 1) * H, :].T)
        # b_hr / b_hz fold into the input-gate bias; b_hn must stay inside r * ( . ).
        bi = bi.at[0:H].set(b_ih[0:H] + b_hh[0:H])
        bi = bi.at[GATE:GATE + H].set(b_ih[H:2 * H] + b_hh[H:2 * H])
        bi = bi.at[2 * GATE:2 * GATE + H].set(b_ih[2 * H:3 * H])
        bh = bh.at[2 * GATE:2 * GATE + H].set(b_hh[2 * H:3 * H])
        return wi, whh, bi, bh

    wi_f, whh_f, bi_f, bh_f = one_dir(ks[0:4])
    wi_b, whh_b, bi_b, bh_b = one_dir(ks[4:8])
    return dict(
        wi=jnp.stack([wi_f, wi_b]).astype(jnp.bfloat16),    # (2, Cp, GP)
        whh=jnp.stack([whh_f, whh_b]).astype(jnp.bfloat16), # (2, GATE, GP)
        bi=jnp.stack([bi_f, bi_b]).reshape(2, 1, GP),       # (2, 1, GP) f32
        bh=jnp.stack([bh_f, bh_b]).reshape(2, 1, GP),       # (2, 1, GP) f32
    )


if __name__ == "__main__":
    key = jax.random.PRNGKey(0)
    B, Cin, T, F = 2, 4, 16, 16
    kernel_size = 3
    pool_size = (2, 2)
    conv_layers_config = [
        dict(n_channels=16, type="single", dropout_rate=0.0),
        dict(n_channels=32, type="single", dropout_rate=0.0),
    ]
    for cfg in conv_layers_config:
        assert cfg["type"] == "single", "TODO(synk): block_type='double' not implemented"
    max_filters = conv_layers_config[-1]["n_channels"]      # 32
    H = max_filters // 2                                    # GRU hidden size = 16

    kx, kp = jax.random.split(key)
    x = jax.random.normal(kx, (B, Cin, T, F), jnp.float32)  # NCHW, as in PyTorch

    pkeys = jax.random.split(kp, len(conv_layers_config) + 1)
    conv_blocks = []
    cin = Cin
    for i, cfg in enumerate(conv_layers_config):
        raw = make_conv_block_params(pkeys[i], cin, cfg["n_channels"], kernel_size)
        conv_blocks.append(pack_conv_block_params(raw, kernel_size))
        cin = cfg["n_channels"]
    params = dict(
        conv_blocks=conv_blocks,
        gru=make_gru_params(pkeys[-1], max_filters, H),
    )
    conv_channels = tuple(cfg["n_channels"] for cfg in conv_layers_config)

    out = feature_extraction_forward(
        x, params, kernel_size=kernel_size, pool_size=pool_size,
        conv_channels=conv_channels)
    out = jax.block_until_ready(out)
    assert out.shape == (B, max_filters), out.shape
    assert bool(jnp.all(jnp.isfinite(out)))
    print("KERNEL_OK")
</pallas_src>

<mosaic_0001>
module attributes {stable_mosaic.version = 11 : i64} {
  func.func @conv_bn_relu_kernel(%arg0: i32, %arg1: memref<256x128xbf16, #tpu.memory_space<vmem>>, %arg2: memref<128x128xbf16, #tpu.memory_space<vmem>>, %arg3: memref<1x128xf32, #tpu.memory_space<vmem>>, %arg4: memref<1x128xf32, #tpu.memory_space<vmem>>, %arg5: memref<256x128xf32, #tpu.memory_space<vmem>>) attributes {dimension_semantics = [#tpu.dimension_semantics<parallel>], iteration_bounds = array<i64: 2>, scalar_prefetch = 0 : i64, scratch_operands = 0 : i64, tpu.core_type = #tpu.core_type<tc>, window_params = [{transform_indices = @transform_0, window_bounds = array<i64: 256, 128>}, {pipeline_mode = #tpu.pipeline_mode<synchronous>, transform_indices = @transform_1, window_bounds = array<i64: 128, 128>}, {pipeline_mode = #tpu.pipeline_mode<synchronous>, transform_indices = @transform_2, window_bounds = array<i64: 1, 128>}, {pipeline_mode = #tpu.pipeline_mode<synchronous>, transform_indices = @transform_3, window_bounds = array<i64: 1, 128>}, {transform_indices = @transform_4, window_bounds = array<i64: 256, 128>}]} {
    %c0 = arith.constant 0 : index
    %c0_0 = arith.constant 0 : index
    %0 = vector.load %arg1[%c0, %c0_0] : memref<256x128xbf16, #tpu.memory_space<vmem>>, vector<256x128xbf16>
    %c0_1 = arith.constant 0 : index
    %c0_2 = arith.constant 0 : index
    %1 = vector.load %arg2[%c0_1, %c0_2] : memref<128x128xbf16, #tpu.memory_space<vmem>>, vector<128x128xbf16>
    %cst = arith.constant dense<0.000000e+00> : vector<256x128xf32>
    %2 = tpu.matmul %0, %1, %cst {dimension_numbers = #tpu.dot_dimension_numbers<[1], [0], [0], [1], [0, 0, 1, 1], [], []>} : vector<256x128xbf16>, vector<128x128xbf16>, vector<256x128xf32> -> vector<256x128xf32>
    %c0_3 = arith.constant 0 : index
    %c0_4 = arith.constant 0 : index
    %3 = vector.load %arg3[%c0_3, %c0_4] : memref<1x128xf32, #tpu.memory_space<vmem>>, vector<1x128xf32>
    %4 = vector.broadcast %3 : vector<1x128xf32> to vector<256x128xf32>
    %5 = arith.mulf %2, %4 : vector<256x128xf32>
    %c0_5 = arith.constant 0 : index
    %c0_6 = arith.constant 0 : index
    %6 = vector.load %arg4[%c0_5, %c0_6] : memref<1x128xf32, #tpu.memory_space<vmem>>, vector<1x128xf32>
    %7 = vector.broadcast %6 : vector<1x128xf32> to vector<256x128xf32>
    %8 = arith.addf %5, %7 : vector<256x128xf32>
    %cst_7 = arith.constant 0.000000e+00 : f32
    %9 = vector.broadcast %cst_7 : f32 to vector<256x128xf32>
    %10 = arith.maximumf %8, %9 : vector<256x128xf32>
    %c0_8 = arith.constant 0 : index
    %c0_9 = arith.constant 0 : index
    %11 = vector.load %arg5[%c0_8, %c0_9] : memref<256x128xf32, #tpu.memory_space<vmem>>, vector<256x128xf32>
    tpu.vector_store %arg5[%c0_8, %c0_9], %10 {strides = array<i32>} : memref<256x128xf32, #tpu.memory_space<vmem>>, vector<256x128xf32>,
    return
  }
  func.func @transform_0(%arg0: i32) -> (i32, i32) {
    %c0_i32 = arith.constant 0 : i32
    %c0_i32_0 = arith.constant 0 : i32
    return %arg0, %c0_i32 : i32, i32
  }
  func.func @transform_1(%arg0: i32) -> (i32, i32) {
    %c0_i32 = arith.constant 0 : i32
    %c0_i32_0 = arith.constant 0 : i32
    %c0_i32_1 = arith.constant 0 : i32
    return %c0_i32, %c0_i32_0 : i32, i32
  }
  func.func @transform_2(%arg0: i32) -> (i32, i32) {
    %c0_i32 = arith.constant 0 : i32
    %c0_i32_0 = arith.constant 0 : i32
    %c0_i32_1 = arith.constant 0 : i32
    return %c0_i32, %c0_i32_0 : i32, i32
  }
  func.func @transform_3(%arg0: i32) -> (i32, i32) {
    %c0_i32 = arith.constant 0 : i32
    %c0_i32_0 = arith.constant 0 : i32
    %c0_i32_1 = arith.constant 0 : i32
    return %c0_i32, %c0_i32_0 : i32, i32
  }
  func.func @transform_4(%arg0: i32) -> (i32, i32) {
    %c0_i32 = arith.constant 0 : i32
    %c0_i32_0 = arith.constant 0 : i32
    return %arg0, %c0_i32 : i32, i32
  }
}

module attributes {stable_mosaic.version = 11 : i64} {
  func.func @conv_bn_relu_kernel(%arg0: i32, %arg1: memref<64x256xbf16, #tpu.memory_space<vmem>>, %arg2: memref<256x128xbf16, #tpu.memory_space<vmem>>, %arg3: memref<1x128xf32, #tpu.memory_space<vmem>>, %arg4: memref<1x128xf32, #tpu.memory_space<vmem>>, %arg5: memref<64x128xf32, #tpu.memory_space<vmem>>) attributes {dimension_semantics = [#tpu.dimension_semantics<parallel>], iteration_bounds = array<i64: 2>, scalar_prefetch = 0 : i64, scratch_operands = 0 : i64, tpu.core_type = #tpu.core_type<tc>, window_params = [{transform_indices = @transform_0, window_bounds = array<i64: 64, 256>}, {pipeline_mode = #tpu.pipeline_mode<synchronous>, transform_indices = @transform_1, window_bounds = array<i64: 256, 128>}, {pipeline_mode = #tpu.pipeline_mode<synchronous>, transform_indices = @transform_2, window_bounds = array<i64: 1, 128>}, {pipeline_mode = #tpu.pipeline_mode<synchronous>, transform_indices = @transform_3, window_bounds = array<i64: 1, 128>}, {transform_indices = @transform_4, window_bounds = array<i64: 64, 128>}]} {
    %c0 = arith.constant 0 : index
    %c0_0 = arith.constant 0 : index
    %0 = vector.load %arg1[%c0, %c0_0] : memref<64x256xbf16, #tpu.memory_space<vmem>>, vector<64x256xbf16>
    %c0_1 = arith.constant 0 : index
    %c0_2 = arith.constant 0 : index
    %1 = vector.load %arg2[%c0_1, %c0_2] : memref<256x128xbf16, #tpu.memory_space<vmem>>, vector<256x128xbf16>
    %cst = arith.constant dense<0.000000e+00> : vector<64x128xf32>
    %2 = tpu.matmul %0, %1, %cst {dimension_numbers = #tpu.dot_dimension_numbers<[1], [0], [0], [1], [0, 0, 1, 1], [], []>} : vector<64x256xbf16>, vector<256x128xbf16>, vector<64x128xf32> -> vector<64x128xf32>
    %c0_3 = arith.constant 0 : index
    %c0_4 = arith.constant 0 : index
    %3 = vector.load %arg3[%c0_3, %c0_4] : memref<1x128xf32, #tpu.memory_space<vmem>>, vector<1x128xf32>
    %4 = vector.broadcast %3 : vector<1x128xf32> to vector<64x128xf32>
    %5 = arith.mulf %2, %4 : vector<64x128xf32>
    %c0_5 = arith.constant 0 : index
    %c0_6 = arith.constant 0 : index
    %6 = vector.load %arg4[%c0_5, %c0_6] : memref<1x128xf32, #tpu.memory_space<vmem>>, vector<1x128xf32>
    %7 = vector.broadcast %6 : vector<1x128xf32> to vector<64x128xf32>
    %8 = arith.addf %5, %7 : vector<64x128xf32>
    %cst_7 = arith.constant 0.000000e+00 : f32
    %9 = vector.broadcast %cst_7 : f32 to vector<64x128xf32>
    %10 = arith.maximumf %8, %9 : vector<64x128xf32>
    %c0_8 = arith.constant 0 : index
    %c0_9 = arith.constant 0 : index
    %11 = vector.load %arg5[%c0_8, %c0_9] : memref<64x128xf32, #tpu.memory_space<vmem>>, vector<64x128xf32>
    tpu.vector_store %arg5[%c0_8, %c0_9], %10 {strides = array<i32>} : memref<64x128xf32, #tpu.memory_space<vmem>>, vector<64x128xf32>,
    return
  }
  func.func @transform_0(%arg0: i32) -> (i32, i32) {
    %c0_i32 = arith.constant 0 : i32
    %c0_i32_0 = arith.constant 0 : i32
    return %arg0, %c0_i32 : i32, i32
  }
  func.func @transform_1(%arg0: i32) -> (i32, i32) {
    %c0_i32 = arith.constant 0 : i32
    %c0_i32_0 = arith.constant 0 : i32
    %c0_i32_1 = arith.constant 0 : i32
    return %c0_i32, %c0_i32_0 : i32, i32
  }
  func.func @transform_2(%arg0: i32) -> (i32, i32) {
    %c0_i32 = arith.constant 0 : i32
    %c0_i32_0 = arith.constant 0 : i32
    %c0_i32_1 = arith.constant 0 : i32
    return %c0_i32, %c0_i32_0 : i32, i32
  }
  func.func @transform_3(%arg0: i32) -> (i32, i32) {
    %c0_i32 = arith.constant 0 : i32
    %c0_i32_0 = arith.constant 0 : i32
    %c0_i32_1 = arith.constant 0 : i32
    return %c0_i32, %c0_i32_0 : i32, i32
  }
  func.func @transform_4(%arg0: i32) -> (i32, i32) {
    %c0_i32 = arith.constant 0 : i32
    %c0_i32_0 = arith.constant 0 : i32
    return %arg0, %c0_i32 : i32, i32
  }
}

module attributes {stable_mosaic.version = 11 : i64} {
  func.func @gru_dir_kernel(%arg0: i32, %arg1: memref<1x8x128xbf16, #tpu.memory_space<vmem>>, %arg2: memref<1x128x384xbf16, #tpu.memory_space<vmem>>, %arg3: memref<1x1x384xf32, #tpu.memory_space<vmem>>, %arg4: memref<1x128x384xbf16, #tpu.memory_space<vmem>>, %arg5: memref<1x1x384xf32, #tpu.memory_space<vmem>>, %arg6: memref<1x2x128xf32, #tpu.memory_space<vmem>>) attributes {dimension_semantics = [#tpu.dimension_semantics<parallel>], iteration_bounds = array<i64: 2>, scalar_prefetch = 0 : i64, scratch_operands = 0 : i64, tpu.core_type = #tpu.core_type<tc>, window_params = [{transform_indices = @transform_0, window_bounds = array<i64: 1, 8, 128>}, {transform_indices = @transform_1, window_bounds = array<i64: 1, 128, 384>}, {transform_indices = @transform_2, window_bounds = array<i64: 1, 1, 384>}, {transform_indices = @transform_3, window_bounds = array<i64: 1, 128, 384>}, {transform_indices = @transform_4, window_bounds = array<i64: 1, 1, 384>}, {transform_indices = @transform_5, window_bounds = array<i64: 1, 2, 128>}]} {
    %c0 = arith.constant 0 : index
    %c0_0 = arith.constant 0 : index
    %c0_1 = arith.constant 0 : index
    %0 = vector.load %arg1[%c0, %c0_0, %c0_1] : memref<1x8x128xbf16, #tpu.memory_space<vmem>>, vector<1x8x128xbf16>
    %1 = vector.shape_cast %0 : vector<1x8x128xbf16> to vector<8x128xbf16>
    %c0_2 = arith.constant 0 : index
    %c0_3 = arith.constant 0 : index
    %c0_4 = arith.constant 0 : index
    %2 = vector.load %arg2[%c0_2, %c0_3, %c0_4] : memref<1x128x384xbf16, #tpu.memory_space<vmem>>, vector<1x128x384xbf16>
    %3 = vector.shape_cast %2 : vector<1x128x384xbf16> to vector<128x384xbf16>
    %c0_5 = arith.constant 0 : index
    %c0_6 = arith.constant 0 : index
    %c0_7 = arith.constant 0 : index
    %4 = vector.load %arg4[%c0_5, %c0_6, %c0_7] : memref<1x128x384xbf16, #tpu.memory_space<vmem>>, vector<1x128x384xbf16>
    %5 = vector.shape_cast %4 : vector<1x128x384xbf16> to vector<128x384xbf16>
    %c0_8 = arith.constant 0 : index
    %c0_9 = arith.constant 0 : index
    %c0_10 = arith.constant 0 : index
    %6 = vector.load %arg3[%c0_8, %c0_9, %c0_10] : memref<1x1x384xf32, #tpu.memory_space<vmem>>, vector<1x1x384xf32>
    %7 = vector.shape_cast %6 : vector<1x1x384xf32> to vector<1x384xf32>
    %c0_11 = arith.constant 0 : index
    %c0_12 = arith.constant 0 : index
    %c0_13 = arith.constant 0 : index
    %8 = vector.load %arg5[%c0_11, %c0_12, %c0_13] : memref<1x1x384xf32, #tpu.memory_space<vmem>>, vector<1x1x384xf32>
    %9 = vector.shape_cast %8 : vector<1x1x384xf32> to vector<1x384xf32>
    %cst = arith.constant dense<0.000000e+00> : vector<8x384xf32>
    %10 = tpu.matmul %1, %3, %cst {dimension_numbers = #tpu.dot_dimension_numbers<[1], [0], [0], [1], [0, 0, 1, 1], [], []>} : vector<8x128xbf16>, vector<128x384xbf16>, vector<8x384xf32> -> vector<8x384xf32>
    %11 = vector.broadcast %7 : vector<1x384xf32> to vector<8x384xf32>
    %12 = arith.addf %10, %11 : vector<8x384xf32>
    %cst_14 = arith.constant 0.000000e+00 : f32
    %13 = vector.broadcast %cst_14 : f32 to vector<2x128xf32>
    %cst_15 = arith.constant 0.000000e+00 : f32
    %14 = vector.broadcast %cst_15 : f32 to vector<2x128xf32>
    %15 = vector.extract_strided_slice %12 {offsets = [0, 0], sizes = [2, 384], strides = [1, 1]} : vector<8x384xf32> to vector<2x384xf32>
    %16 = arith.truncf %13 : vector<2x128xf32> to vector<2x128xbf16>
    %cst_16 = arith.constant dense<0.000000e+00> : vector<2x384xf32>
    %17 = tpu.matmul %16, %5, %cst_16 {dimension_numbers = #tpu.dot_dimension_numbers<[1], [0], [0], [1], [0, 0, 1, 1], [], []>} : vector<2x128xbf16>, vector<128x384xbf16>, vector<2x384xf32> -> vector<2x384xf32>
    %18 = vector.broadcast %9 : vector<1x384xf32> to vector<2x384xf32>
    %19 = arith.addf %17, %18 : vector<2x384xf32>
    %20 = vector.extract_strided_slice %15 {offsets = [0, 0], sizes = [2, 256], strides = [1, 1]} : vector<2x384xf32> to vector<2x256xf32>
    %21 = vector.extract_strided_slice %19 {offsets = [0, 0], sizes = [2, 256], strides = [1, 1]} : vector<2x384xf32> to vector<2x256xf32>
    %22 = arith.addf %20, %21 : vector<2x256xf32>
    %23 = arith.negf %22 : vector<2x256xf32>
    %24 = math.exp %23 : vector<2x256xf32>
    %cst_17 = arith.constant 1.000000e+00 : f32
    %25 = vector.broadcast %cst_17 : f32 to vector<2x256xf32>
    %26 = arith.addf %25, %24 : vector<2x256xf32>
    %27 = arith.divf %25, %26 : vector<2x256xf32>
    %28 = vector.extract_strided_slice %27 {offsets = [0, 0], sizes = [2, 128], strides = [1, 1]} : vector<2x256xf32> to vector<2x128xf32>
    %29 = vector.extract_strided_slice %27 {offsets = [0, 128], sizes = [2, 128], strides = [1, 1]} : vector<2x256xf32> to vector<2x128xf32>
    %30 = vector.extract_strided_slice %15 {offsets = [0, 256], sizes = [2, 128], strides = [1, 1]} : vector<2x384xf32> to vector<2x128xf32>
    %31 = vector.extract_strided_slice %19 {offsets = [0, 256], sizes = [2, 128], strides = [1, 1]} : vector<2x384xf32> to vector<2x128xf32>
    %32 = arith.mulf %28, %31 : vector<2x128xf32>
    %33 = arith.addf %30, %32 : vector<2x128xf32>
    %34 = math.tanh %33 : vector<2x128xf32>
    %cst_18 = arith.constant 1.000000e+00 : f32
    %35 = vector.broadcast %cst_18 : f32 to vector<2x128xf32>
    %36 = arith.subf %35, %29 : vector<2x128xf32>
    %37 = arith.mulf %36, %34 : vector<2x128xf32>
    %38 = arith.mulf %29, %13 : vector<2x128xf32>
    %39 = arith.addf %37, %38 : vector<2x128xf32>
    %40 = arith.addf %14, %39 : vector<2x128xf32>
    %41 = vector.extract_strided_slice %12 {offsets = [2, 0], sizes = [2, 384], strides = [1, 1]} : vector<8x384xf32> to vector<2x384xf32>
    %42 = arith.truncf %39 : vector<2x128xf32> to vector<2x128xbf16>
    %cst_19 = arith.constant dense<0.000000e+00> : vector<2x384xf32>
    %43 = tpu.matmul %42, %5, %cst_19 {dimension_numbers = #tpu.dot_dimension_numbers<[1], [0], [0], [1], [0, 0, 1, 1], [], []>} : vector<2x128xbf16>, vector<128x384xbf16>, vector<2x384xf32> -> vector<2x384xf32>
    %44 = vector.broadcast %9 : vector<1x384xf32> to vector<2x384xf32>
    %45 = arith.addf %43, %44 : vector<2x384xf32>
    %46 = vector.extract_strided_slice %41 {offsets = [0, 0], sizes = [2, 256], strides = [1, 1]} : vector<2x384xf32> to vector<2x256xf32>
    %47 = vector.extract_strided_slice %45 {offsets = [0, 0], sizes = [2, 256], strides = [1, 1]} : vector<2x384xf32> to vector<2x256xf32>
    %48 = arith.addf %46, %47 : vector<2x256xf32>
    %49 = arith.negf %48 : vector<2x256xf32>
    %50 = math.exp %49 : vector<2x256xf32>
    %cst_20 = arith.constant 1.000000e+00 : f32
    %51 = vector.broadcast %cst_20 : f32 to vector<2x256xf32>
    %52 = arith.addf %51, %50 : vector<2x256xf32>
    %53 = arith.divf %51, %52 : vector<2x256xf32>
    %54 = vector.extract_strided_slice %53 {offsets = [0, 0], sizes = [2, 128], strides = [1, 1]} : vector<2x256xf32> to vector<2x128xf32>
    %55 = vector.extract_strided_slice %53 {offsets = [0, 128], sizes = [2, 128], strides = [1, 1]} : vector<2x256xf32> to vector<2x128xf32>
    %56 = vector.extract_strided_slice %41 {offsets = [0, 256], sizes = [2, 128], strides = [1, 1]} : vector<2x384xf32> to vector<2x128xf32>
    %57 = vector.extract_strided_slice %45 {offsets = [0, 256], sizes = [2, 128], strides = [1, 1]} : vector<2x384xf32> to vector<2x128xf32>
    %58 = arith.mulf %54, %57 : vector<2x128xf32>
    %59 = arith.addf %56, %58 : vector<2x128xf32>
    %60 = math.tanh %59 : vector<2x128xf32>
    %cst_21 = arith.constant 1.000000e+00 : f32
    %61 = vector.broadcast %cst_21 : f32 to vector<2x128xf32>
    %62 = arith.subf %61, %55 : vector<2x128xf32>
    %63 = arith.mulf %62, %60 : vector<2x128xf32>
    %64 = arith.mulf %55, %39 : vector<2x128xf32>
    %65 = arith.addf %63, %64 : vector<2x128xf32>
    %66 = arith.addf %40, %65 : vector<2x128xf32>
    %67 = vector.extract_strided_slice %12 {offsets = [4, 0], sizes = [2, 384], strides = [1, 1]} : vector<8x384xf32> to vector<2x384xf32>
    %68 = arith.truncf %65 : vector<2x128xf32> to vector<2x128xbf16>
    %cst_22 = arith.constant dense<0.000000e+00> : vector<2x384xf32>
    %69 = tpu.matmul %68, %5, %cst_22 {dimension_numbers = #tpu.dot_dimension_numbers<[1], [0], [0], [1], [0, 0, 1, 1], [], []>} : vector<2x128xbf16>, vector<128x384xbf16>, vector<2x384xf32> -> vector<2x384xf32>
    %70 = vector.broadcast %9 : vector<1x384xf32> to vector<2x384xf32>
    %71 = arith.addf %69, %70 : vector<2x384xf32>
    %72 = vector.extract_strided_slice %67 {offsets = [0, 0], sizes = [2, 256], strides = [1, 1]} : vector<2x384xf32> to vector<2x256xf32>
    %73 = vector.extract_strided_slice %71 {offsets = [0, 0], sizes = [2, 256], strides = [1, 1]} : vector<2x384xf32> to vector<2x256xf32>
    %74 = arith.addf %72, %73 : vector<2x256xf32>
    %75 = arith.negf %74 : vector<2x256xf32>
    %76 = math.exp %75 : vector<2x256xf32>
    %cst_23 = arith.constant 1.000000e+00 : f32
    %77 = vector.broadcast %cst_23 : f32 to vector<2x256xf32>
    %78 = arith.addf %77, %76 : vector<2x256xf32>
    %79 = arith.divf %77, %78 : vector<2x256xf32>
    %80 = vector.extract_strided_slice %79 {offsets = [0, 0], sizes = [2, 128], strides = [1, 1]} : vector<2x256xf32> to vector<2x128xf32>
    %81 = vector.extract_strided_slice %79 {offsets = [0, 128], sizes = [2, 128], strides = [1, 1]} : vector<2x256xf32> to vector<2x128xf32>
    %82 = vector.extract_strided_slice %67 {offsets = [0, 256], sizes = [2, 128], strides = [1, 1]} : vector<2x384xf32> to vector<2x128xf32>
    %83 = vector.extract_strided_slice %71 {offsets = [0, 256], sizes = [2, 128], strides = [1, 1]} : vector<2x384xf32> to vector<2x128xf32>
    %84 = arith.mulf %80, %83 : vector<2x128xf32>
    %85 = arith.addf %82, %84 : vector<2x128xf32>
    %86 = math.tanh %85 : vector<2x128xf32>
    %cst_24 = arith.constant 1.000000e+00 : f32
    %87 = vector.broadcast %cst_24 : f32 to vector<2x128xf32>
    %88 = arith.subf %87, %81 : vector<2x128xf32>
    %89 = arith.mulf %88, %86 : vector<2x128xf32>
    %90 = arith.mulf %81, %65 : vector<2x128xf32>
    %91 = arith.addf %89, %90 : vector<2x128xf32>
    %92 = arith.addf %66, %91 : vector<2x128xf32>
    %93 = vector.extract_strided_slice %12 {offsets = [6, 0], sizes = [2, 384], strides = [1, 1]} : vector<8x384xf32> to vector<2x384xf32>
    %94 = arith.truncf %91 : vector<2x128xf32> to vector<2x128xbf16>
    %cst_25 = arith.constant dense<0.000000e+00> : vector<2x384xf32>
    %95 = tpu.matmul %94, %5, %cst_25 {dimension_numbers = #tpu.dot_dimension_numbers<[1], [0], [0], [1], [0, 0, 1, 1], [], []>} : vector<2x128xbf16>, vector<128x384xbf16>, vector<2x384xf32> -> vector<2x384xf32>
    %96 = vector.broadcast %9 : vector<1x384xf32> to vector<2x384xf32>
    %97 = arith.addf %95, %96 : vector<2x384xf32>
    %98 = vector.extract_strided_slice %93 {offsets = [0, 0], sizes = [2, 256], strides = [1, 1]} : vector<2x384xf32> to vector<2x256xf32>
    %99 = vector.extract_strided_slice %97 {offsets = [0, 0], sizes = [2, 256], strides = [1, 1]} : vector<2x384xf32> to vector<2x256xf32>
    %100 = arith.addf %98, %99 : vector<2x256xf32>
    %101 = arith.negf %100 : vector<2x256xf32>
    %102 = math.exp %101 : vector<2x256xf32>
    %cst_26 = arith.constant 1.000000e+00 : f32
    %103 = vector.broadcast %cst_26 : f32 to vector<2x256xf32>
    %104 = arith.addf %103, %102 : vector<2x256xf32>
    %105 = arith.divf %103, %104 : vector<2x256xf32>
    %106 = vector.extract_strided_slice %105 {offsets = [0, 0], sizes = [2, 128], strides = [1, 1]} : vector<2x256xf32> to vector<2x128xf32>
    %107 = vector.extract_strided_slice %105 {offsets = [0, 128], sizes = [2, 128], strides = [1, 1]} : vector<2x256xf32> to vector<2x128xf32>
    %108 = vector.extract_strided_slice %93 {offsets = [0, 256], sizes = [2, 128], strides = [1, 1]} : vector<2x384xf32> to vector<2x128xf32>
    %109 = vector.extract_strided_slice %97 {offsets = [0, 256], sizes = [2, 128], strides = [1, 1]} : vector<2x384xf32> to vector<2x128xf32>
    %110 = arith.mulf %106, %109 : vector<2x128xf32>
    %111 = arith.addf %108, %110 : vector<2x128xf32>
    %112 = math.tanh %111 : vector<2x128xf32>
    %cst_27 = arith.constant 1.000000e+00 : f32
    %113 = vector.broadcast %cst_27 : f32 to vector<2x128xf32>
    %114 = arith.subf %113, %107 : vector<2x128xf32>
    %115 = arith.mulf %114, %112 : vector<2x128xf32>
    %116 = arith.mulf %107, %91 : vector<2x128xf32>
    %117 = arith.addf %115, %116 : vector<2x128xf32>
    %118 = arith.addf %92, %117 : vector<2x128xf32>
    %cst_28 = arith.constant 2.500000e-01 : f32
    %119 = vector.broadcast %cst_28 : f32 to vector<2x128xf32>
    %120 = arith.mulf %118, %119 : vector<2x128xf32>
    %c0_29 = arith.constant 0 : index
    %c0_30 = arith.constant 0 : index
    %c0_31 = arith.constant 0 : index
    %121 = vector.load %arg6[%c0_29, %c0_30, %c0_31] : memref<1x2x128xf32, #tpu.memory_space<vmem>>, vector<1x2x128xf32>
    %122 = vector.shape_cast %121 : vector<1x2x128xf32> to vector<2x128xf32>
    %123 = vector.shape_cast %120 : vector<2x128xf32> to vector<1x2x128xf32>
    tpu.vector_store %arg6[%c0_29, %c0_30, %c0_31], %123 {strides = array<i32>} : memref<1x2x128xf32, #tpu.memory_space<vmem>>, vector<1x2x128xf32>,
    return
  }
  func.func @transform_0(%arg0: i32) -> (i32, i32, i32) {
    %c0_i32 = arith.constant 0 : i32
    %c0_i32_0 = arith.constant 0 : i32
    %c0_i32_1 = arith.constant 0 : i32
    return %arg0, %c0_i32, %c0_i32_0 : i32, i32, i32
  }
  func.func @transform_1(%arg0: i32) -> (i32, i32, i32) {
    %c0_i32 = arith.constant 0 : i32
    %c0_i32_0 = arith.constant 0 : i32
    %c0_i32_1 = arith.constant 0 : i32
    return %arg0, %c0_i32, %c0_i32_0 : i32, i32, i32
  }
  func.func @transform_2(%arg0: i32) -> (i32, i32, i32) {
    %c0_i32 = arith.constant 0 : i32
    %c0_i32_0 = arith.constant 0 : i32
    %c0_i32_1 = arith.constant 0 : i32
    return %arg0, %c0_i32, %c0_i32_0 : i32, i32, i32
  }
  func.func @transform_3(%arg0: i32) -> (i32, i32, i32) {
    %c0_i32 = arith.constant 0 : i32
    %c0_i32_0 = arith.constant 0 : i32
    %c0_i32_1 = arith.constant 0 : i32
    return %arg0, %c0_i32, %c0_i32_0 : i32, i32, i32
  }
  func.func @transform_4(%arg0: i32) -> (i32, i32, i32) {
    %c0_i32 = arith.constant 0 : i32
    %c0_i32_0 = arith.constant 0 : i32
    %c0_i32_1 = arith.constant 0 : i32
    return %arg0, %c0_i32, %c0_i32_0 : i32, i32, i32
  }
  func.func @transform_5(%arg0: i32) -> (i32, i32, i32) {
    %c0_i32 = arith.constant 0 : i32
    %c0_i32_0 = arith.constant 0 : i32
    %c0_i32_1 = arith.constant 0 : i32
    return %arg0, %c0_i32, %c0_i32_0 : i32, i32, i32
  }
}

</mosaic_0001>

<llo_original>
// kernel: feature_extraction_forward.3
$region0: #{feature_extraction_forward.3}
  #allocation0 [shape = 'u32[]', space=smem, size = 0x4, offset = 0x4, fixed_abs, tag = 'smem constant byte address 0x4 - core index']
  #allocation1 [shape = 'u32[144,128]{1,0:T(1,128)}', space=vmem, size = 0x12000, scoped, tag = 'internal scratch']
  %s0 = inlined_call_operand.vmem [shape: bf16[512,128], index: 0, kind: input, shape index: {}]
  %s1 = inlined_call_operand.vmem [shape: bf16[128,128], index: 1, kind: input, shape index: {}]
  %s2 = inlined_call_operand.vmem [shape: f32[1,128], index: 2, kind: input, shape index: {}]
  %s3 = inlined_call_operand.vmem [shape: f32[1,128], index: 3, kind: input, shape index: {}]
  %s4 = inlined_call_operand.vmem [shape: f32[512,128], index: 4, kind: output, shape index: {}]
  %s5 = sld [smem:[#allocation0]]
  $region49: #{feature_extraction_forward.3} parent=0
    _
  %s7 = ssub.s32 1, %s5
  %s8 = scalar_select 0, %s7, %s5
  loop: start=0, step=1, limit=4
  $region2: #{feature_extraction_forward.3} parent=0 // loop_pre_header
    _
  $region3: #{feature_extraction_forward.3} parent=0 // loop_header
    %s10 = sphi 0, %s14
    %p11 = scmp.ge.s32.totalorder %s10, 4
    %s20 = sphi 0, %s22
    %s23 = sphi 0, %s20
    %s24 = sphi 0, %s23
    %s40 = sphi 0, %s24
    %s44 = sphi 0, %s44
    %s46 = sphi 0, %s44
    %s47 = sphi 0, %s46
    %s61 = sphi 0, %s47
    %s65 = sphi 0, %s65
    %s67 = sphi 0, %s65
    %s68 = sphi 0, %s67
    %s82 = sphi 0, %s68
    %s86 = sphi 0, %s86
    %s88 = sphi 0, %s86
    %s89 = sphi 0, %s88
    %s103 = sphi 0, %s89
    %s109 = sphi 0, %s111
    %s112 = sphi 0, %s109
    %s113 = sphi 0, %s112
    %s129 = sphi 0, %s113
  $region4: #{feature_extraction_forward.3} parent=0 // loop_header_branch
    %13 = sbr.rel (%p11) target = $region8
  $region5: #{feature_extraction_forward.3} parent=0 // loop_body
    %s15 = ssub.s32 %s10, 1
    %s16 = ssub.s32 %s10, 2
    %s17 = sadd.s32 %s10, 1
    %s18 = ssub.s32 %s10, %s17
    %p19 = scmp.eq.s32.totalorder %s18, 0
    %s21 = sadd.s32 %s20, 1
    %s22 = scalar_select %p19, %s20, %s21
    %p25 = pneg %p19
    %p26 = scmp.eq.s32.totalorder %s10, 1
    %p27 = por %p25, %p26
    %p28 = scmp.ne.s32.totalorder %s20, %s23
    %p29 = scmp.eq.s32.totalorder %s10, 0
    %p30 = por %p28, %p29
    %p31 = scmp.ne.s32.totalorder %s20, %s23
    %p32 = scmp.eq.s32.totalorder %s15, 1
    %p33 = por %p31, %p32
    %p34 = scmp.ne.s32.totalorder %s23, %s24
    %p35 = scmp.eq.s32.totalorder %s15, 0
    %p36 = por %p34, %p35
    %p37 = scmp.ne.s32.totalorder %s23, %s24
    %p38 = scmp.eq.s32.totalorder %s16, 1
    %p39 = por %p37, %p38
    %p41 = scmp.ne.s32.totalorder %s24, %s40
    %p42 = scmp.eq.s32.totalorder %s16, 0
    %p43 = por %p41, %p42
    %s45 = sadd.s32 %s44, 1
    %p48 = scmp.eq.s32.totalorder %s10, 1
    %p49 = scmp.ne.s32.totalorder %s44, %s46
    %p50 = scmp.eq.s32.totalorder %s10, 0
    %p51 = por %p49, %p50
    %p52 = scmp.ne.s32.totalorder %s44, %s46
    %p53 = scmp.eq.s32.totalorder %s15, 1
    %p54 = por %p52, %p53
    %p55 = scmp.ne.s32.totalorder %s46, %s47
    %p56 = scmp.eq.s32.totalorder %s15, 0
    %p57 = por %p55, %p56
    %p58 = scmp.ne.s32.totalorder %s46, %s47
    %p59 = scmp.eq.s32.totalorder %s16, 1
    %p60 = por %p58, %p59
    %p62 = scmp.ne.s32.totalorder %s47, %s61
    %p63 = scmp.eq.s32.totalorder %s16, 0
    %p64 = por %p62, %p63
    %s66 = sadd.s32 %s65, 1
    %p69 = scmp.eq.s32.totalorder %s10, 1
    %p70 = scmp.ne.s32.totalorder %s65, %s67
    %p71 = scmp.eq.s32.totalorder %s10, 0
    %p72 = por %p70, %p71
    %p73 = scmp.ne.s32.totalorder %s65, %s67
    %p74 = scmp.eq.s32.totalorder %s15, 1
    %p75 = por %p73, %p74
    %p76 = scmp.ne.s32.totalorder %s67, %s68
    %p77 = scmp.eq.s32.totalorder %s15, 0
    %p78 = por %p76, %p77
    %p79 = scmp.ne.s32.totalorder %s67, %s68
    %p80 = scmp.eq.s32.totalorder %s16, 1
    %p81 = por %p79, %p80
    %p83 = scmp.ne.s32.totalorder %s68, %s82
    %p84 = scmp.eq.s32.totalorder %s16, 0
    %p85 = por %p83, %p84
    %s87 = sadd.s32 %s86, 1
    %p90 = scmp.eq.s32.totalorder %s10, 1
    %p91 = scmp.ne.s32.totalorder %s86, %s88
    %p92 = scmp.eq.s32.totalorder %s10, 0
    %p93 = por %p91, %p92
    %p94 = scmp.ne.s32.totalorder %s86, %s88
    %p95 = scmp.eq.s32.totalorder %s15, 1
    %p96 = por %p94, %p95
    %p97 = scmp.ne.s32.totalorder %s88, %s89
    %p98 = scmp.eq.s32.totalorder %s15, 0
    %p99 = por %p97, %p98
    %p100 = scmp.ne.s32.totalorder %s88, %s89
    %p101 = scmp.eq.s32.totalorder %s16, 1
    %p102 = por %p100, %p101
    %p104 = scmp.ne.s32.totalorder %s89, %s103
    %p105 = scmp.eq.s32.totalorder %s16, 0
    %p106 = por %p104, %p105
    %s107 = ssub.s32 %s10, %s17
    %p108 = scmp.eq.s32.totalorder %s107, 0
    %s110 = sadd.s32 %s109, 1
    %s111 = scalar_select %p108, %s109, %s110
    %p114 = pneg %p108
    %p115 = scmp.eq.s32.totalorder %s10, 1
    %p116 = por %p114, %p115
    %p117 = scmp.ne.s32.totalorder %s109, %s112
    %p118 = scmp.eq.s32.totalorder %s10, 0
    %p119 = por %p117, %p118
    %p120 = scmp.ne.s32.totalorder %s109, %s112
    %p121 = scmp.eq.s32.totalorder %s15, 1
    %p122 = por %p120, %p121
    %p123 = scmp.ne.s32.totalorder %s112, %s113
    %p124 = scmp.eq.s32.totalorder %s15, 0
    %p125 = por %p123, %p124
    %p126 = scmp.ne.s32.totalorder %s112, %s113
    %p127 = scmp.eq.s32.totalorder %s16, 1
    %p128 = por %p126, %p127
    %p130 = scmp.ne.s32.totalorder %s113, %s129
    %p131 = scmp.eq.s32.totalorder %s16, 0
    %p132 = por %p130, %p131
    %p133 = scmp.le.s32.totalorder 1, %s10
    %p134 = scmp.lt.s32.totalorder %s10, 3
    %p135 = pnand %p133, %p134
    %p136 = pneg %p135
    // Predicated region
    $region9: #{feature_extraction_forward.3} parent=5 // pred_check
      _
    $region10: #{feature_extraction_forward.3} parent=5 // pred_check_branch
      %138 = sbr.rel (%p135) target = $region12
    $region11: #{feature_extraction_forward.3} parent=5 // pred_region
      %s139 = ssub.s32 %s10, 1
      // Predicated region
      $region13: #{feature_extraction_forward.3} parent=11 // pred_check
        %p140 = pneg %p57
      $region14: #{feature_extraction_forward.3} parent=11 // pred_check_branch
        %142 = sbr.rel (%p140) target = $region16
      $region15: #{feature_extraction_forward.3} parent=11 // pred_region
        _
      $region16: #{feature_extraction_forward.3} parent=11 // pred_fallthru
        _
      // Predicated region
      $region17: #{feature_extraction_forward.3} parent=11 // pred_check
        %p143 = pneg %p78
      $region18: #{feature_extraction_forward.3} parent=11 // pred_check_branch
        %145 = sbr.rel (%p143) target = $region20
      $region19: #{feature_extraction_forward.3} parent=11 // pred_region
        _
      $region20: #{feature_extraction_forward.3} parent=11 // pred_fallthru
        _
      // Predicated region
      $region21: #{feature_extraction_forward.3} parent=11 // pred_check
        %p146 = pneg %p99
      $region22: #{feature_extraction_forward.3} parent=11 // pred_check_branch
        %148 = sbr.rel (%p146) target = $region24
      $region23: #{feature_extraction_forward.3} parent=11 // pred_region
        _
      $region24: #{feature_extraction_forward.3} parent=11 // pred_fallthru
        _
    $region12: #{feature_extraction_forward.3} parent=5 // pred_fallthru
      _
    %p149 = scmp.lt.s32.totalorder %s10, 2
    // Predicated region
    $region25: #{feature_extraction_forward.3} parent=5 // pred_check
      %p150 = pneg %p149
    $region26: #{feature_extraction_forward.3} parent=5 // pred_check_branch
      %152 = sbr.rel (%p150) target = $region28
    $region27: #{feature_extraction_forward.3} parent=5 // pred_region
      // Predicated region
      $region29: #{feature_extraction_forward.3} parent=27 // pred_check
        %p153 = pneg %p30
      $region30: #{feature_extraction_forward.3} parent=27 // pred_check_branch
        %155 = sbr.rel (%p153) target = $region32
      $region31: #{feature_extraction_forward.3} parent=27 // pred_region
        %s156 = smul.u32 32, %s10
        %p157 = scmp.lt.s32.totalorder %s156, 63
        %s158 = scalar_select %p157, %s156, 63
        %s159 = smul.addr %s158, 4
        %s160 = scalar_lea.vmem %s0, %s159
        %s161 = smul.u32 32, %s10
      $region32: #{feature_extraction_forward.3} parent=27 // pred_fallthru
        _
    $region28: #{feature_extraction_forward.3} parent=5 // pred_fallthru
      _
    %p162 = scmp.le.s32.totalorder 1, %s10
    %p163 = scmp.lt.s32.totalorder %s10, 3
    %p164 = pnand %p162, %p163
    %p165 = pneg %p164
    // Predicated region
    $region33: #{feature_extraction_forward.3} parent=5 // pred_check
      _
    $region34: #{feature_extraction_forward.3} parent=5 // pred_check_branch
      %167 = sbr.rel (%p164) target = $region36
    $region35: #{feature_extraction_forward.3} parent=5 // pred_region
      %s168 = ssub.s32 %s10, 1
      %s169 = smul.u32 32, %s15
      %p170 = scmp.lt.s32.totalorder %s169, 63
      %s171 = scalar_select %p170, %s169, 63
      %s172 = smul.addr %s171, 4
      %s173 = scalar_lea.vmem %s0, %s172
      %p174 = pneg %p36
      %p175 = pneg %p33
      %p176 = pneg %p57
      %p177 = pneg %p54
      %p178 = pneg %p78
      %p179 = pneg %p75
      %p180 = pneg %p99
      %p181 = pneg %p96
      %p182 = pneg %p125
      %p183 = pneg %p122
      %s184 = smul.u32 32, %s15
      %p185 = scmp.lt.s32.totalorder %s184, 63
      %s186 = scalar_select %p185, %s184, 63
      %s187 = smul.addr %s186, 8
      %s188 = scalar_lea.vmem %s4, %s187
      %s189 = smul.u32 32, %s15
      %p190 = scmp.lt.s32.totalorder %s189, 63
      %s191 = scalar_select %p190, %s189, 63
      %s192 = smul.addr %s191, 4
      %s193 = scalar_lea.vmem %s0, %s192
      %s194 = smul.u32 32, %s15
      %s195 = smul.u32 32, %s15
      %p196 = scmp.lt.s32.totalorder %s195, 63
      %s197 = scalar_select %p196, %s195, 63
      %s198 = smul.addr %s197, 8
      %s199 = scalar_lea.vmem %s4, %s198
      %s200 = smul.u32 32, %s15
      %v202 = vld [vmem:[%s193] sm:$0xf]
      %v203 = vld [vmem:[%s193 + $0x4] sm:$0xf]
      %v204 = vld [vmem:[%s193 + $0x8] sm:$0xf]
      %v205 = vld [vmem:[%s193 + $0xc] sm:$0xf]
      %v206 = vld [vmem:[%s193 + $0x10] sm:$0xf]
      %v207 = vld [vmem:[%s193 + $0x14] sm:$0xf]
      %v208 = vld [vmem:[%s193 + $0x18] sm:$0xf]
      %v209 = vld [vmem:[%s193 + $0x1c] sm:$0xf]
      %v210 = vld [vmem:[%s193 + $0x20] sm:$0xf]
      %v211 = vld [vmem:[%s193 + $0x24] sm:$0xf]
      %v212 = vld [vmem:[%s193 + $0x28] sm:$0xf]
      %v213 = vld [vmem:[%s193 + $0x2c] sm:$0xf]
      %v214 = vld [vmem:[%s193 + $0x30] sm:$0xf]
      %v215 = vld [vmem:[%s193 + $0x34] sm:$0xf]
      %v216 = vld [vmem:[%s193 + $0x38] sm:$0xf]
      %v217 = vld [vmem:[%s193 + $0x3c] sm:$0xf]
      %v218 = vld [vmem:[%s193 + $0x40] sm:$0xf]
      %v219 = vld [vmem:[%s193 + $0x44] sm:$0xf]
      %v220 = vld [vmem:[%s193 + $0x48] sm:$0xf]
      %v221 = vld [vmem:[%s193 + $0x4c] sm:$0xf]
      %v222 = vld [vmem:[%s193 + $0x50] sm:$0xf]
      %v223 = vld [vmem:[%s193 + $0x54] sm:$0xf]
      %v224 = vld [vmem:[%s193 + $0x58] sm:$0xf]
      %v225 = vld [vmem:[%s193 + $0x5c] sm:$0xf]
      %v226 = vld [vmem:[%s193 + $0x60] sm:$0xf]
      %v227 = vld [vmem:[%s193 + $0x64] sm:$0xf]
      %v228 = vld [vmem:[%s193 + $0x68] sm:$0xf]
      %v229 = vld [vmem:[%s193 + $0x6c] sm:$0xf]
      %v230 = vld [vmem:[%s193 + $0x70] sm:$0xf]
      %v231 = vld [vmem:[%s193 + $0x74] sm:$0xf]
      %v232 = vld [vmem:[%s193 + $0x78] sm:$0xf]
      %v233 = vld [vmem:[%s193 + $0x7c] sm:$0xf]
      %v234 = vld [vmem:[%s1] sm:$0xf]
      %v235 = vld [vmem:[%s1 + $0x4] sm:$0xf]
      %v236 = vld [vmem:[%s1 + $0x8] sm:$0xf]
      %v237 = vld [vmem:[%s1 + $0xc] sm:$0xf]
      %v238 = vld [vmem:[%s1 + $0x10] sm:$0xf]
      %v239 = vld [vmem:[%s1 + $0x14] sm:$0xf]
      %v240 = vld [vmem:[%s1 + $0x18] sm:$0xf]
      %v241 = vld [vmem:[%s1 + $0x1c] sm:$0xf]
      %v242 = vld [vmem:[%s1 + $0x20] sm:$0xf]
      %v243 = vld [vmem:[%s1 + $0x24] sm:$0xf]
      %v244 = vld [vmem:[%s1 + $0x28] sm:$0xf]
      %v245 = vld [vmem:[%s1 + $0x2c] sm:$0xf]
      %v246 = vld [vmem:[%s1 + $0x30] sm:$0xf]
      %v247 = vld [vmem:[%s1 + $0x34] sm:$0xf]
      %v248 = vld [vmem:[%s1 + $0x38] sm:$0xf]
      %v249 = vld [vmem:[%s1 + $0x3c] sm:$0xf]
      %v282 = vunpack.c.l.b16 %v202
      %v283 = vunpack.c.l.b16 %v203
      %v284 = vunpack.c.l.b16 %v204
      %v285 = vunpack.c.l.b16 %v205
      %v286 = vunpack.c.l.b16 %v206
      %v287 = vunpack.c.l.b16 %v207
      %v288 = vunpack.c.l.b16 %v208
      %v289 = vunpack.c.l.b16 %v209
      %v290 = vunpack.c.l.b16 %v210
      %v291 = vunpack.c.l.b16 %v211
      %v292 = vunpack.c.l.b16 %v212
      %v293 = vunpack.c.l.b16 %v213
      %v294 = vunpack.c.l.b16 %v214
      %v295 = vunpack.c.l.b16 %v215
      %v296 = vunpack.c.l.b16 %v216
      %v297 = vunpack.c.l.b16 %v217
      %v298 = vunpack.c.l.b16 %v218
      %v299 = vunpack.c.l.b16 %v219
      %v300 = vunpack.c.l.b16 %v220
      %v301 = vunpack.c.l.b16 %v221
      %v302 = vunpack.c.l.b16 %v222
      %v303 = vunpack.c.l.b16 %v223
      %v304 = vunpack.c.l.b16 %v224
      %v305 = vunpack.c.l.b16 %v225
      %v306 = vunpack.c.l.b16 %v226
      %v307 = vunpack.c.l.b16 %v227
      %v308 = vunpack.c.l.b16 %v228
      %v309 = vunpack.c.l.b16 %v229
      %v310 = vunpack.c.l.b16 %v230
      %v311 = vunpack.c.l.b16 %v231
      %v312 = vunpack.c.l.b16 %v232
      %v313 = vunpack.c.l.b16 %v233
      %v314 = vpack.c.b16 %v283, %v282
      %v315 = vpack.c.b16 %v285, %v284
      %v316 = vpack.c.b16 %v287, %v286
      %v317 = vpack.c.b16 %v289, %v288
      %v318 = vpack.c.b16 %v291, %v290
      %v319 = vpack.c.b16 %v293, %v292
      %v320 = vpack.c.b16 %v295, %v294
      %v321 = vpack.c.b16 %v297, %v296
      %v322 = vpack.c.b16 %v299, %v298
      %v323 = vpack.c.b16 %v301, %v300
      %v324 = vpack.c.b16 %v303, %v302
      %v325 = vpack.c.b16 %v305, %v304
      %v326 = vpack.c.b16 %v307, %v306
      %v327 = vpack.c.b16 %v309, %v308
      %v328 = vpack.c.b16 %v311, %v310
      %v329 = vpack.c.b16 %v313, %v312
      %v362 = vunpack.c.l.b16 %v234
      %v363 = vunpack.c.l.b16 %v235
      %v364 = vunpack.c.l.b16 %v236
      %v365 = vunpack.c.l.b16 %v237
      %v366 = vunpack.c.l.b16 %v238
      %v367 = vunpack.c.l.b16 %v239
      %v368 = vunpack.c.l.b16 %v240
      %v369 = vunpack.c.l.b16 %v241
      %v370 = vunpack.c.l.b16 %v242
      %v371 = vunpack.c.l.b16 %v243
      %v372 = vunpack.c.l.b16 %v244
      %v373 = vunpack.c.l.b16 %v245
      %v374 = vunpack.c.l.b16 %v246
      %v375 = vunpack.c.l.b16 %v247
      %v376 = vunpack.c.l.b16 %v248
      %v377 = vunpack.c.l.b16 %v249
      %v378 = vpack.c.b16 %v363, %v362
      %v379 = vpack.c.b16 %v365, %v364
      %v380 = vpack.c.b16 %v367, %v366
      %v381 = vpack.c.b16 %v369, %v368
      %v382 = vpack.c.b16 %v371, %v370
      %v383 = vpack.c.b16 %v373, %v372
      %v384 = vpack.c.b16 %v375, %v374
      %v385 = vpack.c.b16 %v377, %v376
      %394 = vmatprep.subr.bf16.mxu0 0
      %395 = vmatpush1.bf16.msra.mxu0 %v378
      %396 = vmatprep.subr.bf16.mxu0 0
      %397 = vmatpush1.bf16.msra.mxu0 %v379
      %398 = vmatprep.subr.bf16.mxu0 0
      %399 = vmatpush1.bf16.msra.mxu0 %v380
      %400 = vmatprep.subr.bf16.mxu0 0
      %401 = vmatpush1.bf16.msra.mxu0 %v381
      %402 = vmatprep.subr.bf16.mxu0 0
      %403 = vmatpush1.bf16.msra.mxu0 %v382
      %404 = vmatprep.subr.bf16.mxu0 0
      %405 = vmatpush1.bf16.msra.mxu0 %v383
      %406 = vmatprep.subr.bf16.mxu0 0
      %407 = vmatpush1.bf16.msra.mxu0 %v384
      %408 = vmatprep.subr.bf16.mxu0 0
      %409 = vmatpush1.bf16.msra.mxu0 %v385
      %410 = vmatprep.subr.bf16.mxu0 0
      %411 = vmatpush1.bf16.msra.mxu0 0
      %412 = vmatprep.subr.bf16.mxu0 0
      %413 = vmatpush1.bf16.msra.mxu0 0
      %414 = vmatprep.subr.bf16.mxu0 0
      %415 = vmatpush1.bf16.msra.mxu0 0
      %416 = vmatprep.subr.bf16.mxu0 0
      %417 = vmatpush1.bf16.msra.mxu0 0
      %418 = vmatprep.subr.bf16.mxu0 0
      %419 = vmatpush1.bf16.msra.mxu0 0
      %420 = vmatprep.subr.bf16.mxu0 0
      %421 = vmatpush1.bf16.msra.mxu0 0
      %422 = vmatprep.subr.bf16.mxu0 0
      %423 = vmatpush1.bf16.msra.mxu0 0
      %424 = vmatprep.subr.bf16.mxu0 0
      %425 = vmatpush1.bf16.msra.mxu0 0
      %426 = vmatprep.mubr.bf16.mxu0 0
      %427 = vmatmul.mubr.bf16.gmra.mrb[0].mxu0 %v314
      %v428 = vpop.f32.mrb[0].mxu0
      %v429 = vadd.f32 0.0, %v428
      %v430 = vpop.f32.mrb[0].mxu0
      %v431 = vpop.f32.mrb[0].mxu0
      %v432 = vadd.f32 0.0, %v431
      %v433 = vpop.f32.mrb[0].mxu0
      %434 = vmatprep.mubr.bf16.mxu0 0
      %435 = vmatmul.mubr.bf16.gmra.mrb[0].mxu0 %v315
      %v436 = vpop.f32.mrb[0].mxu0
      %v437 = vadd.f32 0.0, %v436
      %v438 = vpop.f32.mrb[0].mxu0
      %v439 = vpop.f32.mrb[0].mxu0
      %v440 = vadd.f32 0.0, %v439
      %v441 = vpop.f32.mrb[0].mxu0
      %442 = vmatprep.mubr.bf16.mxu0 0
      %443 = vmatmul.mubr.bf16.gmra.mrb[0].mxu0 %v316
      %v444 = vpop.f32.mrb[0].mxu0
      %v445 = vadd.f32 0.0, %v444
      %v446 = vpop.f32.mrb[0].mxu0
      %v447 = vpop.f32.mrb[0].mxu0
      %v448 = vadd.f32 0.0, %v447
      %v449 = vpop.f32.mrb[0].mxu0
      %450 = vmatprep.mubr.bf16.mxu0 0
      %451 = vmatmul.mubr.bf16.gmra.mrb[0].mxu0 %v317
      %v452 = vpop.f32.mrb[0].mxu0
      %v453 = vadd.f32 0.0, %v452
      %v454 = vpop.f32.mrb[0].mxu0
      %v455 = vpop.f32.mrb[0].mxu0
      %v456 = vadd.f32 0.0, %v455
      %v457 = vpop.f32.mrb[0].mxu0
      %458 = vmatprep.mubr.bf16.mxu0 0
      %459 = vmatmul.mubr.bf16.gmra.mrb[0].mxu0 %v318
      %v460 = vpop.f32.mrb[0].mxu0
      %v461 = vadd.f32 0.0, %v460
      %v462 = vpop.f32.mrb[0].mxu0
      %v463 = vpop.f32.mrb[0].mxu0
      %v464 = vadd.f32 0.0, %v463
      %v465 = vpop.f32.mrb[0].mxu0
      %466 = vmatprep.mubr.bf16.mxu0 0
      %467 = vmatmul.mubr.bf16.gmra.mrb[0].mxu0 %v319
      %v468 = vpop.f32.mrb[0].mxu0
      %v469 = vadd.f32 0.0, %v468
      %v470 = vpop.f32.mrb[0].mxu0
      %v471 = vpop.f32.mrb[0].mxu0
      %v472 = vadd.f32 0.0, %v471
      %v473 = vpop.f32.mrb[0].mxu0
      %474 = vmatprep.mubr.bf16.mxu0 0
      %475 = vmatmul.mubr.bf16.gmra.mrb[0].mxu0 %v320
      %v476 = vpop.f32.mrb[0].mxu0
      %v477 = vadd.f32 0.0, %v476
      %v478 = vpop.f32.mrb[0].mxu0
      %v479 = vpop.f32.mrb[0].mxu0
      %v480 = vadd.f32 0.0, %v479
      %v481 = vpop.f32.mrb[0].mxu0
      %482 = vmatprep.mubr.bf16.mxu0 0
      %483 = vmatmul.mubr.bf16.gmra.mrb[0].mxu0 %v321
      %v484 = vpop.f32.mrb[0].mxu0
      %v485 = vadd.f32 0.0, %v484
      %v486 = vpop.f32.mrb[0].mxu0
      %v487 = vpop.f32.mrb[0].mxu0
      %v488 = vadd.f32 0.0, %v487
      %v489 = vpop.f32.mrb[0].mxu0
      %490 = vmatprep.mubr.bf16.mxu0 0
      %491 = vmatmul.mubr.bf16.gmra.mrb[0].mxu0 %v322
      %v492 = vpop.f32.mrb[0].mxu0
      %v493 = vadd.f32 0.0, %v492
      %v494 = vpop.f32.mrb[0].mxu0
      %v495 = vpop.f32.mrb[0].mxu0
      %v496 = vadd.f32 0.0, %v495
      %v497 = vpop.f32.mrb[0].mxu0
      %498 = vmatprep.mubr.bf16.mxu0 0
      %499 = vmatmul.mubr.bf16.gmra.mrb[0].mxu0 %v323
      %v500 = vpop.f32.mrb[0].mxu0
      %v501 = vadd.f32 0.0, %v500
      %v502 = vpop.f32.mrb[0].mxu0
      %v503 = vpop.f32.mrb[0].mxu0
      %v504 = vadd.f32 0.0, %v503
      %v505 = vpop.f32.mrb[0].mxu0
      %506 = vmatprep.mubr.bf16.mxu0 0
      %507 = vmatmul.mubr.bf16.gmra.mrb[0].mxu0 %v324
      %v508 = vpop.f32.mrb[0].mxu0
      %v509 = vadd.f32 0.0, %v508
      %v510 = vpop.f32.mrb[0].mxu0
      %v511 = vpop.f32.mrb[0].mxu0
      %v512 = vadd.f32 0.0, %v511
      %v513 = vpop.f32.mrb[0].mxu0
      %514 = vmatprep.mubr.bf16.mxu0 0
      %515 = vmatmul.mubr.bf16.gmra.mrb[0].mxu0 %v325
      %v516 = vpop.f32.mrb[0].mxu0
      %v517 = vadd.f32 0.0, %v516
      %v518 = vpop.f32.mrb[0].mxu0
      %v519 = vpop.f32.mrb[0].mxu0
      %v520 = vadd.f32 0.0, %v519
      %v521 = vpop.f32.mrb[0].mxu0
      %522 = vmatprep.mubr.bf16.mxu0 0
      %523 = vmatmul.mubr.bf16.gmra.mrb[0].mxu0 %v326
      %v524 = vpop.f32.mrb[0].mxu0
      %v525 = vadd.f32 0.0, %v524
      %v526 = vpop.f32.mrb[0].mxu0
      %v527 = vpop.f32.mrb[0].mxu0
      %v528 = vadd.f32 0.0, %v527
      %v529 = vpop.f32.mrb[0].mxu0
      %530 = vmatprep.mubr.bf16.mxu0 0
      %531 = vmatmul.mubr.bf16.gmra.mrb[0].mxu0 %v327
      %v532 = vpop.f32.mrb[0].mxu0
      %v533 = vadd.f32 0.0, %v532
      %v534 = vpop.f32.mrb[0].mxu0
      %v535 = vpop.f32.mrb[0].mxu0
      %v536 = vadd.f32 0.0, %v535
      %v537 = vpop.f32.mrb[0].mxu0
      %538 = vmatprep.mubr.bf16.mxu0 0
      %539 = vmatmul.mubr.bf16.gmra.mrb[0].mxu0 %v328
      %v540 = vpop.f32.mrb[0].mxu0
      %v541 = vadd.f32 0.0, %v540
      %v542 = vpop.f32.mrb[0].mxu0
      %v543 = vpop.f32.mrb[0].mxu0
      %v544 = vadd.f32 0.0, %v543
      %v545 = vpop.f32.mrb[0].mxu0
      %546 = vmatprep.mubr.bf16.mxu0 0
      %547 = vmatmul.mubr.bf16.gmra.mrb[0].mxu0 %v329
      %v548 = vpop.f32.mrb[0].mxu0
      %v549 = vadd.f32 0.0, %v548
      %v550 = vpop.f32.mrb[0].mxu0
      %v551 = vpop.f32.mrb[0].mxu0
      %v552 = vadd.f32 0.0, %v551
      %v553 = vpop.f32.mrb[0].mxu0
      %554 = vdwg.mxu0
      %v555 = vld [vmem:[%s2] sm:$0x1]
      %v557 = vlaneseq
      %v558 = vshrl.u32 %v557, 7
      %v559 = vsub.s32 0, %v558
      %v560 = vrot.slane %v555, %v559
      %v562 = vmul.f32 %v429, %v560
      %v563 = vmul.f32 %v432, %v560
      %v564 = vmul.f32 %v437, %v560
      %v565 = vmul.f32 %v440, %v560
      %v566 = vmul.f32 %v445, %v560
      %v567 = vmul.f32 %v448, %v560
      %v568 = vmul.f32 %v453, %v560
      %v569 = vmul.f32 %v456, %v560
      %v570 = vmul.f32 %v461, %v560
      %v571 = vmul.f32 %v464, %v560
      %v572 = vmul.f32 %v469, %v560
      %v573 = vmul.f32 %v472, %v560
      %v574 = vmul.f32 %v477, %v560
      %v575 = vmul.f32 %v480, %v560
      %v576 = vmul.f32 %v485, %v560
      %v577 = vmul.f32 %v488, %v560
      %v578 = vmul.f32 %v493, %v560
      %v579 = vmul.f32 %v496, %v560
      %v580 = vmul.f32 %v501, %v560
      %v581 = vmul.f32 %v504, %v560
      %v582 = vmul.f32 %v509, %v560
      %v583 = vmul.f32 %v512, %v560
      %v584 = vmul.f32 %v517, %v560
      %v585 = vmul.f32 %v520, %v560
      %v586 = vmul.f32 %v525, %v560
      %v587 = vmul.f32 %v528, %v560
      %v588 = vmul.f32 %v533, %v560
      %v589 = vmul.f32 %v536, %v560
      %v590 = vmul.f32 %v541, %v560
      %v591 = vmul.f32 %v544, %v560
      %v592 = vmul.f32 %v549, %v560
      %v593 = vmul.f32 %v552, %v560
      %v594 = vld [vmem:[%s3] sm:$0x1]
      %v596 = vlaneseq
      %v597 = vshrl.u32 %v596, 7
      %v598 = vsub.s32 0, %v597
      %v599 = vrot.slane %v594, %v598
      %v601 = vadd.f32 %v562, %v599
      %v602 = vadd.f32 %v563, %v599
      %v603 = vadd.f32 %v564, %v599
      %v604 = vadd.f32 %v565, %v599
      %v605 = vadd.f32 %v566, %v599
      %v606 = vadd.f32 %v567, %v599
      %v607 = vadd.f32 %v568, %v599
      %v608 = vadd.f32 %v569, %v599
      %v609 = vadd.f32 %v570, %v599
      %v610 = vadd.f32 %v571, %v599
      %v611 = vadd.f32 %v572, %v599
      %v612 = vadd.f32 %v573, %v599
      %v613 = vadd.f32 %v574, %v599
      %v614 = vadd.f32 %v575, %v599
      %v615 = vadd.f32 %v576, %v599
      %v616 = vadd.f32 %v577, %v599
      %v617 = vadd.f32 %v578, %v599
      %v618 = vadd.f32 %v579, %v599
      %v619 = vadd.f32 %v580, %v599
      %v620 = vadd.f32 %v581, %v599
      %v621 = vadd.f32 %v582, %v599
      %v622 = vadd.f32 %v583, %v599
      %v623 = vadd.f32 %v584, %v599
      %v624 = vadd.f32 %v585, %v599
      %v625 = vadd.f32 %v586, %v599
      %v626 = vadd.f32 %v587, %v599
      %v627 = vadd.f32 %v588, %v599
      %v628 = vadd.f32 %v589, %v599
      %v629 = vadd.f32 %v590, %v599
      %v630 = vadd.f32 %v591, %v599
      %v631 = vadd.f32 %v592, %v599
      %v632 = vadd.f32 %v593, %v599
      %v633 = vmax.f32 %v601, 0.0
      %v634 = vmax.f32 %v602, 0.0
      %v635 = vmax.f32 %v603, 0.0
      %v636 = vmax.f32 %v604, 0.0
      %v637 = vmax.f32 %v605, 0.0
      %v638 = vmax.f32 %v606, 0.0
      %v639 = vmax.f32 %v607, 0.0
      %v640 = vmax.f32 %v608, 0.0
      %v641 = vmax.f32 %v609, 0.0
      %v642 = vmax.f32 %v610, 0.0
      %v643 = vmax.f32 %v611, 0.0
      %v644 = vmax.f32 %v612, 0.0
      %v645 = vmax.f32 %v613, 0.0
      %v646 = vmax.f32 %v614, 0.0
      %v647 = vmax.f32 %v615, 0.0
      %v648 = vmax.f32 %v616, 0.0
      %v649 = vmax.f32 %v617, 0.0
      %v650 = vmax.f32 %v618, 0.0
      %v651 = vmax.f32 %v619, 0.0
      %v652 = vmax.f32 %v620, 0.0
      %v653 = vmax.f32 %v621, 0.0
      %v654 = vmax.f32 %v622, 0.0
      %v655 = vmax.f32 %v623, 0.0
      %v656 = vmax.f32 %v624, 0.0
      %v657 = vmax.f32 %v625, 0.0
      %v658 = vmax.f32 %v626, 0.0
      %v659 = vmax.f32 %v627, 0.0
      %v660 = vmax.f32 %v628, 0.0
      %v661 = vmax.f32 %v629, 0.0
      %v662 = vmax.f32 %v630, 0.0
      %v663 = vmax.f32 %v631, 0.0
      %v664 = vmax.f32 %v632, 0.0
      %665 = vst [vmem:[%s199] sm:$0xff] %v633
      %666 = vst [vmem:[%s199 + $0x8] sm:$0xff] %v634
      %667 = vst [vmem:[%s199 + $0x10] sm:$0xff] %v635
      %668 = vst [vmem:[%s199 + $0x18] sm:$0xff] %v636
      %669 = vst [vmem:[%s199 + $0x20] sm:$0xff] %v637
      %670 = vst [vmem:[%s199 + $0x28] sm:$0xff] %v638
      %671 = vst [vmem:[%s199 + $0x30] sm:$0xff] %v639
      %672 = vst [vmem:[%s199 + $0x38] sm:$0xff] %v640
      %673 = vst [vmem:[%s199 + $0x40] sm:$0xff] %v641
      %674 = vst [vmem:[%s199 + $0x48] sm:$0xff] %v642
      %675 = vst [vmem:[%s199 + $0x50] sm:$0xff] %v643
      %676 = vst [vmem:[%s199 + $0x58] sm:$0xff] %v644
      %677 = vst [vmem:[%s199 + $0x60] sm:$0xff] %v645
      %678 = vst [vmem:[%s199 + $0x68] sm:$0xff] %v646
      %679 = vst [vmem:[%s199 + $0x70] sm:$0xff] %v647
      %680 = vst [vmem:[%s199 + $0x78] sm:$0xff] %v648
      %681 = vst [vmem:[%s199 + $0x80] sm:$0xff] %v649
      %682 = vst [vmem:[%s199 + $0x88] sm:$0xff] %v650
      %683 = vst [vmem:[%s199 + $0x90] sm:$0xff] %v651
      %684 = vst [vmem:[%s199 + $0x98] sm:$0xff] %v652
      %685 = vst [vmem:[%s199 + $0xa0] sm:$0xff] %v653
      %686 = vst [vmem:[%s199 + $0xa8] sm:$0xff] %v654
      %687 = vst [vmem:[%s199 + $0xb0] sm:$0xff] %v655
      %688 = vst [vmem:[%s199 + $0xb8] sm:$0xff] %v656
      %689 = vst [vmem:[%s199 + $0xc0] sm:$0xff] %v657
      %690 = vst [vmem:[%s199 + $0xc8] sm:$0xff] %v658
      %691 = vst [vmem:[%s199 + $0xd0] sm:$0xff] %v659
      %692 = vst [vmem:[%s199 + $0xd8] sm:$0xff] %v660
      %693 = vst [vmem:[%s199 + $0xe0] sm:$0xff] %v661
      %694 = vst [vmem:[%s199 + $0xe8] sm:$0xff] %v662
      %695 = vst [vmem:[%s199 + $0xf0] sm:$0xff] %v663
      %696 = vst [vmem:[%s199 + $0xf8] sm:$0xff] %v664
      %s697 = smul.u32 32, %s15
      %p698 = scmp.lt.s32.totalorder %s697, 63
      %s699 = scalar_select %p698, %s697, 63
      %s700 = smul.addr %s699, 8
      %s701 = scalar_lea.vmem %s4, %s700
      // Predicated region
      $region37: #{feature_extraction_forward.3} parent=35 // pred_check
        %p702 = pneg %p122
      $region38: #{feature_extraction_forward.3} parent=35 // pred_check_branch
        %704 = sbr.rel (%p702) target = $region40
      $region39: #{feature_extraction_forward.3} parent=35 // pred_region
        %s705 = smul.u32 32, %s15
      $region40: #{feature_extraction_forward.3} parent=35 // pred_fallthru
        _
    $region36: #{feature_extraction_forward.3} parent=5 // pred_fallthru
      _
    %p706 = scmp.le.s32.totalorder 2, %s10
    // Predicated region
    $region41: #{feature_extraction_forward.3} parent=5 // pred_check
      %p707 = pneg %p706
    $region42: #{feature_extraction_forward.3} parent=5 // pred_check_branch
      %709 = sbr.rel (%p707) target = $region44
    $region43: #{feature_extraction_forward.3} parent=5 // pred_region
      %s710 = ssub.s32 %s10, 2
      // Predicated region
      $region45: #{feature_extraction_forward.3} parent=43 // pred_check
        %p711 = pneg %p128
      $region46: #{feature_extraction_forward.3} parent=43 // pred_check_branch
        %713 = sbr.rel (%p711) target = $region48
      $region47: #{feature_extraction_forward.3} parent=43 // pred_region
        %s714 = smul.u32 32, %s16
        %p715 = scmp.lt.s32.totalorder %s714, 63
        %s716 = scalar_select %p715, %s714, 63
        %s717 = smul.addr %s716, 8
        %s718 = scalar_lea.vmem %s4, %s717
      $region48: #{feature_extraction_forward.3} parent=43 // pred_fallthru
        _
    $region44: #{feature_extraction_forward.3} parent=5 // pred_fallthru
      _
  $region6: #{feature_extraction_forward.3} parent=0 // loop_footer
    %s14 = sadd.s32 1, %s10
  $region7: #{feature_extraction_forward.3} parent=0 // loop_footer_branch
    %9 = sbr.rel target = $region3
  $region8: #{feature_extraction_forward.3} parent=0 // loop_exit
    _

// kernel: reverse
$region0: #{reverse}
  %s0 = inlined_call_operand.vmem [shape: f32[4,2,32], index: 0, kind: input, shape index: {}]
  %s1 = inlined_call_operand.vmem [shape: f32[4,2,32], index: 1, kind: output, shape index: {}]
  $region1: #{reverse} parent=0
    #allocation0 [shape = 'u8[16384]{0}', space=vmem, size = 0x4000, scoped, tag = 'operand span for operand 0']
    #allocation1 [shape = 'u8[8192]{0}', space=vmem, size = 0x2000, scoped, tag = 'packed  for operand 0']
    #allocation2 [shape = 'u8[8192]{0}', space=vmem, size = 0x2000, scoped, tag = 'operand span for operand 1']
    #allocation3 [shape = 'u8[4096]{0}', space=vmem, size = 0x1000, scoped, tag = 'packed  for operand 1']
    %s2 = scalar_lea.vmem [#allocation1], 4
    // Predicated region
    $region2: #{reverse} parent=1 // pred_check
      _
    $region3: #{reverse} parent=1 // pred_check_branch
      %4 = sbr.rel (0) target = $region5
    $region4: #{reverse} parent=1 // pred_region
      // Predicated region
      $region6: #{reverse} parent=4 // pred_check
        _
      $region7: #{reverse} parent=4 // pred_check_branch
        %6 = sbr.rel target = $region9
      $region8: #{reverse} parent=4 // pred_region
        // Predicated region
        $region21: #{reverse} parent=8 // pred_check
          _
        $region22: #{reverse} parent=8 // pred_check_branch
          %23 = sbr.rel (0) target = $region24
        $region23: #{reverse} parent=8 // pred_region
          loop: start=0, step=1, limit=1
          $region25: #{reverse} parent=23 // loop_pre_header
            _
          $region26: #{reverse} parent=23 // loop_header
            %s25 = sphi 0, %s29
            %p26 = scmp.ge.s32.totalorder %s25, 1
            %s30 = sphi %s0, %s0
            %s31 = sphi %s2, %s2
          $region27: #{reverse} parent=23 // loop_header_branch
            %28 = sbr.rel (%p26) target = $region31
          $region28: #{reverse} parent=23 // loop_body
            _
          $region29: #{reverse} parent=23 // loop_footer
            %s29 = sadd.s32 1, %s25
          $region30: #{reverse} parent=23 // loop_footer_branch
            %24 = sbr.rel target = $region26
          $region31: #{reverse} parent=23 // loop_exit
            _
          loop: start=0, step=1, limit=1
          $region32: #{reverse} parent=23 // loop_pre_header
            _
          $region33: #{reverse} parent=23 // loop_header
            %s34 = sphi 0, %s38
            %p35 = scmp.ge.s32.totalorder %s34, 1
            %s39 = sphi %s0, %s0
            %s40 = sphi %s2, %s2
          $region34: #{reverse} parent=23 // loop_header_branch
            %37 = sbr.rel (%p35) target = $region38
          $region35: #{reverse} parent=23 // loop_body
            %v41 = vld [vmem:[%s39] sm:$0xf]
            %42 = vst [vmem:[%s40] sm:$0xf] %v41
            %v43 = vld [vmem:[%s39 + $0x4] sm:$0xf]
            %44 = vst [vmem:[%s40 + $0x8] sm:$0xf] %v43
          $region36: #{reverse} parent=23 // loop_footer
            %s38 = sadd.s32 1, %s34
          $region37: #{reverse} parent=23 // loop_footer_branch
            %33 = sbr.rel target = $region33
          $region38: #{reverse} parent=23 // loop_exit
            _
        $region24: #{reverse} parent=8 // pred_fallthru
          _
      $region9: #{reverse} parent=4 // pred_fallthru
        _
      // Predicated region
      $region10: #{reverse} parent=4 // pred_check
        _
      $region11: #{reverse} parent=4 // pred_check_branch
        %8 = sbr.rel (0) target = $region13
      $region12: #{reverse} parent=4 // pred_region
        loop: start=0, step=1, limit=1
        $region14: #{reverse} parent=12 // loop_pre_header
          _
        $region15: #{reverse} parent=12 // loop_header
          %s11 = sphi 0, %s15
          %p12 = scmp.ge.s32.totalorder %s11, 1
          %s16 = sphi %s0, %s0
          %s17 = sphi %s2, %s2
        $region16: #{reverse} parent=12 // loop_header_branch
          %14 = sbr.rel (%p12) target = $region20
        $region17: #{reverse} parent=12 // loop_body
          %v18 = vld [vmem:[%s16] sm:$0xf]
          %19 = vst [vmem:[%s17] sm:$0xf] %v18
          %v20 = vld [vmem:[%s16 + $0x4] sm:$0xf]
          %21 = vst [vmem:[%s17 + $0x8] sm:$0xf] %v20
        $region18: #{reverse} parent=12 // loop_footer
          %s15 = sadd.s32 1, %s11
        $region19: #{reverse} parent=12 // loop_footer_branch
          %10 = sbr.rel target = $region15
        $region20: #{reverse} parent=12 // loop_exit
          _
      $region13: #{reverse} parent=4 // pred_fallthru
        _
    $region5: #{reverse} parent=1 // pred_fallthru
      _
    %45 = vnop
    %s47 = sshllo.u32 0, 4
    %s48 = smul.addr 4, 3
    %s49 = scalar_lea.vmem [#allocation1], %s48
    %v50 = vld [vmem:[%s49] sm:%s47]
    %s51 = scalar_lea.vmem [#allocation0], 24
    %52 = vst [vmem:[%s51] sm:%s47] %v50
    %s53 = smul.addr 4, 2
    %s54 = scalar_lea.vmem [#allocation1], %s53
    %v55 = vld [vmem:[%s54] sm:%s47]
    %s56 = scalar_lea.vmem [#allocation0], 16
    %57 = vst [vmem:[%s56] sm:%s47] %v55
    %s58 = scalar_lea.vmem [#allocation1], 4
    %v59 = vld [vmem:[%s58] sm:%s47]
    %s60 = scalar_lea.vmem [#allocation0], 8
    %61 = vst [vmem:[%s60] sm:%s47] %v59
    %v62 = vld [vmem:[#allocation1] sm:%s47]
    %63 = vst [vmem:[#allocation0] sm:%s47] %v62
    %s64 = scalar_lea.vmem [#allocation0], 7
    %v65 = vld [vmem:[%s64] ss:$-1 sm:$0xff]
    %v66 = vrot.slane %v65, 4
    %67 = vst [vmem:[#allocation2] sm:$0xff] %v66
    %s68 = scalar_lea.vmem [#allocation0], 8
    %s69 = scalar_lea.vmem %s68, 7 [#allocation0]
    %v70 = vld [vmem:[%s69] ss:$-1 sm:$0xff]
    %v71 = vrot.slane %v70, 4
    %v72 = vlaneseq
    %v73 = vshrl.u32 %v72, 7
    %vm74 = vcmp.lt.s32.totalorder %v73, 4
    %75 = vst.msk [vmem:[#allocation2] sm:$0xff] %vm74, %v71
    %s76 = scalar_lea.vmem [#allocation2], 8
    %s77 = scalar_lea.vmem [#allocation0], 16
    %s78 = scalar_lea.vmem %s77, 7 [#allocation0]
    %v79 = vld [vmem:[%s78] ss:$-1 sm:$0xff]
    %v80 = vrot.slane %v79, 4
    %81 = vst [vmem:[%s76] sm:$0xff] %v80
    %s82 = scalar_lea.vmem %s77, 8 [#allocation0]
    %s83 = scalar_lea.vmem %s82, 7 [#allocation0]
    %v84 = vld [vmem:[%s83] ss:$-1 sm:$0xff]
    %v85 = vrot.slane %v84, 4
    %v86 = vlaneseq
    %v87 = vshrl.u32 %v86, 7
    %vm88 = vcmp.lt.s32.totalorder %v87, 4
    %89 = vst.msk [vmem:[%s76] sm:$0xff] %vm88, %v85
    %s91 = sshllo.u32 0, 4
    %v93 = vld [vmem:[#allocation2] sm:%s91]
    %s94 = sshllo.u32 0, 4
    %95 = vst [vmem:[#allocation3] sm:%s94] %v93
    %s96 = scalar_lea.vmem [#allocation2], 8
    %v97 = vld [vmem:[%s96] sm:%s91]
    %s98 = sshllo.u32 0, 4
    %s99 = scalar_lea.vmem [#allocation3], 4
    %100 = vst [vmem:[%s99] sm:%s98] %v97
    // Predicated region
    $region39: #{reverse} parent=1 // pred_check
      _
    $region40: #{reverse} parent=1 // pred_check_branch
      %102 = sbr.rel (0) target = $region42
    $region41: #{reverse} parent=1 // pred_region
      // Predicated region
      $region43: #{reverse} parent=41 // pred_check
        _
      $region44: #{reverse} parent=41 // pred_check_branch
        %104 = sbr.rel target = $region46
      $region45: #{reverse} parent=41 // pred_region
        // Predicated region
        $region58: #{reverse} parent=45 // pred_check
          _
        $region59: #{reverse} parent=45 // pred_check_branch
          %121 = sbr.rel (0) target = $region61
        $region60: #{reverse} parent=45 // pred_region
          loop: start=0, step=1, limit=1
          $region62: #{reverse} parent=60 // loop_pre_header
            _
          $region63: #{reverse} parent=60 // loop_header
            %s123 = sphi 0, %s127
            %p124 = scmp.ge.s32.totalorder %s123, 1
            %s128 = sphi [#allocation3], [#allocation3]
            %s129 = sphi %s1, %s1
          $region64: #{reverse} parent=60 // loop_header_branch
            %126 = sbr.rel (%p124) target = $region68
          $region65: #{reverse} parent=60 // loop_body
            _
          $region66: #{reverse} parent=60 // loop_footer
            %s127 = sadd.s32 1, %s123
          $region67: #{reverse} parent=60 // loop_footer_branch
            %122 = sbr.rel target = $region63
          $region68: #{reverse} parent=60 // loop_exit
            _
          loop: start=0, step=1, limit=1
          $region69: #{reverse} parent=60 // loop_pre_header
            _
          $region70: #{reverse} parent=60 // loop_header
            %s132 = sphi 0, %s136
            %p133 = scmp.ge.s32.totalorder %s132, 1
            %s137 = sphi [#allocation3], [#allocation3]
            %s138 = sphi %s1, %s1
          $region71: #{reverse} parent=60 // loop_header_branch
            %135 = sbr.rel (%p133) target = $region75
          $region72: #{reverse} parent=60 // loop_body
            %v139 = vld [vmem:[%s137] sm:$0xf]
            %140 = vst [vmem:[%s138] sm:$0xf] %v139
            %v141 = vld [vmem:[%s137 + $0x4] sm:$0xf]
            %142 = vst [vmem:[%s138 + $0x4] sm:$0xf] %v141
          $region73: #{reverse} parent=60 // loop_footer
            %s136 = sadd.s32 1, %s132
          $region74: #{reverse} parent=60 // loop_footer_branch
            %131 = sbr.rel target = $region70
          $region75: #{reverse} parent=60 // loop_exit
            _
        $region61: #{reverse} parent=45 // pred_fallthru
          _
      $region46: #{reverse} parent=41 // pred_fallthru
        _
      // Predicated region
      $region47: #{reverse} parent=41 // pred_check
        _
      $region48: #{reverse} parent=41 // pred_check_branch
        %106 = sbr.rel (0) target = $region50
      $region49: #{reverse} parent=41 // pred_region
        loop: start=0, step=1, limit=1
        $region51: #{reverse} parent=49 // loop_pre_header
          _
        $region52: #{reverse} parent=49 // loop_header
          %s109 = sphi 0, %s113
          %p110 = scmp.ge.s32.totalorder %s109, 1
          %s114 = sphi [#allocation3], [#allocation3]
          %s115 = sphi %s1, %s1
        $region53: #{reverse} parent=49 // loop_header_branch
          %112 = sbr.rel (%p110) target = $region57
        $region54: #{reverse} parent=49 // loop_body
          %v116 = vld [vmem:[%s114] sm:$0xf]
          %117 = vst [vmem:[%s115] sm:$0xf] %v116
          %v118 = vld [vmem:[%s114 + $0x4] sm:$0xf]
          %119 = vst [vmem:[%s115 + $0x4] sm:$0xf] %v118
        $region55: #{reverse} parent=49 // loop_footer
          %s113 = sadd.s32 1, %s109
        $region56: #{reverse} parent=49 // loop_footer_branch
          %108 = sbr.rel target = $region52
        $region57: #{reverse} parent=49 // loop_exit
          _
      $region50: #{reverse} parent=41 // pred_fallthru
        _
    $region42: #{reverse} parent=1 // pred_fallthru
      _
    %143 = vnop

// kernel: feature_extraction_forward.4
$region0: #{feature_extraction_forward.4}
  #allocation0 [shape = 'u32[]', space=smem, size = 0x4, offset = 0x4, fixed_abs, tag = 'smem constant byte address 0x4 - core index']
  #allocation1 [shape = 'u32[144,128]{1,0:T(1,128)}', space=vmem, size = 0x12000, scoped, tag = 'internal scratch']
  %s0 = inlined_call_operand.vmem [shape: bf16[128,256], index: 0, kind: input, shape index: {}]
  %s1 = inlined_call_operand.vmem [shape: bf16[256,128], index: 1, kind: input, shape index: {}]
  %s2 = inlined_call_operand.vmem [shape: f32[1,128], index: 2, kind: input, shape index: {}]
  %s3 = inlined_call_operand.vmem [shape: f32[1,128], index: 3, kind: input, shape index: {}]
  %s4 = inlined_call_operand.vmem [shape: f32[128,128], index: 4, kind: output, shape index: {}]
  %s5 = sld [smem:[#allocation0]]
  $region49: #{feature_extraction_forward.4} parent=0
    _
  %s7 = ssub.s32 1, %s5
  %s8 = scalar_select 0, %s7, %s5
  loop: start=0, step=1, limit=4
  $region2: #{feature_extraction_forward.4} parent=0 // loop_pre_header
    _
  $region3: #{feature_extraction_forward.4} parent=0 // loop_header
    %s10 = sphi 0, %s14
    %p11 = scmp.ge.s32.totalorder %s10, 4
    %s20 = sphi 0, %s22
    %s23 = sphi 0, %s20
    %s24 = sphi 0, %s23
    %s40 = sphi 0, %s24
    %s44 = sphi 0, %s44
    %s46 = sphi 0, %s44
    %s47 = sphi 0, %s46
    %s61 = sphi 0, %s47
    %s65 = sphi 0, %s65
    %s67 = sphi 0, %s65
    %s68 = sphi 0, %s67
    %s82 = sphi 0, %s68
    %s86 = sphi 0, %s86
    %s88 = sphi 0, %s86
    %s89 = sphi 0, %s88
    %s103 = sphi 0, %s89
    %s109 = sphi 0, %s111
    %s112 = sphi 0, %s109
    %s113 = sphi 0, %s112
    %s129 = sphi 0, %s113
  $region4: #{feature_extraction_forward.4} parent=0 // loop_header_branch
    %13 = sbr.rel (%p11) target = $region8
  $region5: #{feature_extraction_forward.4} parent=0 // loop_body
    %s15 = ssub.s32 %s10, 1
    %s16 = ssub.s32 %s10, 2
    %s17 = sadd.s32 %s10, 1
    %s18 = ssub.s32 %s10, %s17
    %p19 = scmp.eq.s32.totalorder %s18, 0
    %s21 = sadd.s32 %s20, 1
    %s22 = scalar_select %p19, %s20, %s21
    %p25 = pneg %p19
    %p26 = scmp.eq.s32.totalorder %s10, 1
    %p27 = por %p25, %p26
    %p28 = scmp.ne.s32.totalorder %s20, %s23
    %p29 = scmp.eq.s32.totalorder %s10, 0
    %p30 = por %p28, %p29
    %p31 = scmp.ne.s32.totalorder %s20, %s23
    %p32 = scmp.eq.s32.totalorder %s15, 1
    %p33 = por %p31, %p32
    %p34 = scmp.ne.s32.totalorder %s23, %s24
    %p35 = scmp.eq.s32.totalorder %s15, 0
    %p36 = por %p34, %p35
    %p37 = scmp.ne.s32.totalorder %s23, %s24
    %p38 = scmp.eq.s32.totalorder %s16, 1
    %p39 = por %p37, %p38
    %p41 = scmp.ne.s32.totalorder %s24, %s40
    %p42 = scmp.eq.s32.totalorder %s16, 0
    %p43 = por %p41, %p42
    %s45 = sadd.s32 %s44, 1
    %p48 = scmp.eq.s32.totalorder %s10, 1
    %p49 = scmp.ne.s32.totalorder %s44, %s46
    %p50 = scmp.eq.s32.totalorder %s10, 0
    %p51 = por %p49, %p50
    %p52 = scmp.ne.s32.totalorder %s44, %s46
    %p53 = scmp.eq.s32.totalorder %s15, 1
    %p54 = por %p52, %p53
    %p55 = scmp.ne.s32.totalorder %s46, %s47
    %p56 = scmp.eq.s32.totalorder %s15, 0
    %p57 = por %p55, %p56
    %p58 = scmp.ne.s32.totalorder %s46, %s47
    %p59 = scmp.eq.s32.totalorder %s16, 1
    %p60 = por %p58, %p59
    %p62 = scmp.ne.s32.totalorder %s47, %s61
    %p63 = scmp.eq.s32.totalorder %s16, 0
    %p64 = por %p62, %p63
    %s66 = sadd.s32 %s65, 1
    %p69 = scmp.eq.s32.totalorder %s10, 1
    %p70 = scmp.ne.s32.totalorder %s65, %s67
    %p71 = scmp.eq.s32.totalorder %s10, 0
    %p72 = por %p70, %p71
    %p73 = scmp.ne.s32.totalorder %s65, %s67
    %p74 = scmp.eq.s32.totalorder %s15, 1
    %p75 = por %p73, %p74
    %p76 = scmp.ne.s32.totalorder %s67, %s68
    %p77 = scmp.eq.s32.totalorder %s15, 0
    %p78 = por %p76, %p77
    %p79 = scmp.ne.s32.totalorder %s67, %s68
    %p80 = scmp.eq.s32.totalorder %s16, 1
    %p81 = por %p79, %p80
    %p83 = scmp.ne.s32.totalorder %s68, %s82
    %p84 = scmp.eq.s32.totalorder %s16, 0
    %p85 = por %p83, %p84
    %s87 = sadd.s32 %s86, 1
    %p90 = scmp.eq.s32.totalorder %s10, 1
    %p91 = scmp.ne.s32.totalorder %s86, %s88
    %p92 = scmp.eq.s32.totalorder %s10, 0
    %p93 = por %p91, %p92
    %p94 = scmp.ne.s32.totalorder %s86, %s88
    %p95 = scmp.eq.s32.totalorder %s15, 1
    %p96 = por %p94, %p95
    %p97 = scmp.ne.s32.totalorder %s88, %s89
    %p98 = scmp.eq.s32.totalorder %s15, 0
    %p99 = por %p97, %p98
    %p100 = scmp.ne.s32.totalorder %s88, %s89
    %p101 = scmp.eq.s32.totalorder %s16, 1
    %p102 = por %p100, %p101
    %p104 = scmp.ne.s32.totalorder %s89, %s103
    %p105 = scmp.eq.s32.totalorder %s16, 0
    %p106 = por %p104, %p105
    %s107 = ssub.s32 %s10, %s17
    %p108 = scmp.eq.s32.totalorder %s107, 0
    %s110 = sadd.s32 %s109, 1
    %s111 = scalar_select %p108, %s109, %s110
    %p114 = pneg %p108
    %p115 = scmp.eq.s32.totalorder %s10, 1
    %p116 = por %p114, %p115
    %p117 = scmp.ne.s32.totalorder %s109, %s112
    %p118 = scmp.eq.s32.totalorder %s10, 0
    %p119 = por %p117, %p118
    %p120 = scmp.ne.s32.totalorder %s109, %s112
    %p121 = scmp.eq.s32.totalorder %s15, 1
    %p122 = por %p120, %p121
    %p123 = scmp.ne.s32.totalorder %s112, %s113
    %p124 = scmp.eq.s32.totalorder %s15, 0
    %p125 = por %p123, %p124
    %p126 = scmp.ne.s32.totalorder %s112, %s113
    %p127 = scmp.eq.s32.totalorder %s16, 1
    %p128 = por %p126, %p127
    %p130 = scmp.ne.s32.totalorder %s113, %s129
    %p131 = scmp.eq.s32.totalorder %s16, 0
    %p132 = por %p130, %p131
    %p133 = scmp.le.s32.totalorder 1, %s10
    %p134 = scmp.lt.s32.totalorder %s10, 3
    %p135 = pnand %p133, %p134
    %p136 = pneg %p135
    // Predicated region
    $region9: #{feature_extraction_forward.4} parent=5 // pred_check
      _
    $region10: #{feature_extraction_forward.4} parent=5 // pred_check_branch
      %138 = sbr.rel (%p135) target = $region12
    $region11: #{feature_extraction_forward.4} parent=5 // pred_region
      %s139 = ssub.s32 %s10, 1
      // Predicated region
      $region13: #{feature_extraction_forward.4} parent=11 // pred_check
        %p140 = pneg %p57
      $region14: #{feature_extraction_forward.4} parent=11 // pred_check_branch
        %142 = sbr.rel (%p140) target = $region16
      $region15: #{feature_extraction_forward.4} parent=11 // pred_region
        _
      $region16: #{feature_extraction_forward.4} parent=11 // pred_fallthru
        _
      // Predicated region
      $region17: #{feature_extraction_forward.4} parent=11 // pred_check
        %p143 = pneg %p78
      $region18: #{feature_extraction_forward.4} parent=11 // pred_check_branch
        %145 = sbr.rel (%p143) target = $region20
      $region19: #{feature_extraction_forward.4} parent=11 // pred_region
        _
      $region20: #{feature_extraction_forward.4} parent=11 // pred_fallthru
        _
      // Predicated region
      $region21: #{feature_extraction_forward.4} parent=11 // pred_check
        %p146 = pneg %p99
      $region22: #{feature_extraction_forward.4} parent=11 // pred_check_branch
        %148 = sbr.rel (%p146) target = $region24
      $region23: #{feature_extraction_forward.4} parent=11 // pred_region
        _
      $region24: #{feature_extraction_forward.4} parent=11 // pred_fallthru
        _
    $region12: #{feature_extraction_forward.4} parent=5 // pred_fallthru
      _
    %p149 = scmp.lt.s32.totalorder %s10, 2
    // Predicated region
    $region25: #{feature_extraction_forward.4} parent=5 // pred_check
      %p150 = pneg %p149
    $region26: #{feature_extraction_forward.4} parent=5 // pred_check_branch
      %152 = sbr.rel (%p150) target = $region28
    $region27: #{feature_extraction_forward.4} parent=5 // pred_region
      // Predicated region
      $region29: #{feature_extraction_forward.4} parent=27 // pred_check
        %p153 = pneg %p30
      $region30: #{feature_extraction_forward.4} parent=27 // pred_check_branch
        %155 = sbr.rel (%p153) target = $region32
      $region31: #{feature_extraction_forward.4} parent=27 // pred_region
        %s156 = smul.u32 8, %s10
        %p157 = scmp.lt.s32.totalorder %s156, 15
        %s158 = scalar_select %p157, %s156, 15
        %s159 = smul.addr %s158, 2
        %s160 = smul.addr %s159, 4
        %s161 = scalar_lea.vmem %s0, %s160
        %s162 = smul.u32 8, %s10
      $region32: #{feature_extraction_forward.4} parent=27 // pred_fallthru
        _
    $region28: #{feature_extraction_forward.4} parent=5 // pred_fallthru
      _
    %p163 = scmp.le.s32.totalorder 1, %s10
    %p164 = scmp.lt.s32.totalorder %s10, 3
    %p165 = pnand %p163, %p164
    %p166 = pneg %p165
    // Predicated region
    $region33: #{feature_extraction_forward.4} parent=5 // pred_check
      _
    $region34: #{feature_extraction_forward.4} parent=5 // pred_check_branch
      %168 = sbr.rel (%p165) target = $region36
    $region35: #{feature_extraction_forward.4} parent=5 // pred_region
      %s169 = ssub.s32 %s10, 1
      %s170 = smul.u32 8, %s15
      %p171 = scmp.lt.s32.totalorder %s170, 15
      %s172 = scalar_select %p171, %s170, 15
      %s173 = smul.addr %s172, 2
      %s174 = smul.addr %s173, 4
      %s175 = scalar_lea.vmem %s0, %s174
      %p176 = pneg %p36
      %p177 = pneg %p33
      %p178 = pneg %p57
      %p179 = pneg %p54
      %p180 = pneg %p78
      %p181 = pneg %p75
      %p182 = pneg %p99
      %p183 = pneg %p96
      %p184 = pneg %p125
      %p185 = pneg %p122
      %s186 = smul.u32 8, %s15
      %p187 = scmp.lt.s32.totalorder %s186, 15
      %s188 = scalar_select %p187, %s186, 15
      %s189 = smul.addr %s188, 8
      %s190 = scalar_lea.vmem %s4, %s189
      %s191 = smul.u32 8, %s15
      %p192 = scmp.lt.s32.totalorder %s191, 15
      %s193 = scalar_select %p192, %s191, 15
      %s194 = smul.addr %s193, 2
      %s195 = smul.addr %s194, 4
      %s196 = scalar_lea.vmem %s0, %s195
      %s197 = smul.u32 8, %s15
      %s198 = smul.u32 8, %s15
      %p199 = scmp.lt.s32.totalorder %s198, 15
      %s200 = scalar_select %p199, %s198, 15
      %s201 = smul.addr %s200, 8
      %s202 = scalar_lea.vmem %s4, %s201
      %s203 = smul.u32 8, %s15
      %v205 = vld [vmem:[%s196] sm:$0xff]
      %v206 = vld [vmem:[%s196 + $0x8] sm:$0xff]
      %v207 = vld [vmem:[%s196 + $0x10] sm:$0xff]
      %v208 = vld [vmem:[%s196 + $0x18] sm:$0xff]
      %v209 = vld [vmem:[%s196 + $0x20] sm:$0xff]
      %v210 = vld [vmem:[%s196 + $0x28] sm:$0xff]
      %v211 = vld [vmem:[%s196 + $0x30] sm:$0xff]
      %v212 = vld [vmem:[%s196 + $0x38] sm:$0xff]
      %v213 = vld [vmem:[%s1] sm:$0xf]
      %v214 = vld [vmem:[%s1 + $0x4] sm:$0xf]
      %v215 = vld [vmem:[%s1 + $0x8] sm:$0xf]
      %v216 = vld [vmem:[%s1 + $0xc] sm:$0xf]
      %v217 = vld [vmem:[%s1 + $0x10] sm:$0xf]
      %v218 = vld [vmem:[%s1 + $0x14] sm:$0xf]
      %v219 = vld [vmem:[%s1 + $0x18] sm:$0xf]
      %v220 = vld [vmem:[%s1 + $0x1c] sm:$0xf]
      %v221 = vld [vmem:[%s1 + $0x20] sm:$0xf]
      %v222 = vld [vmem:[%s1 + $0x24] sm:$0xf]
      %v223 = vld [vmem:[%s1 + $0x28] sm:$0xf]
      %v224 = vld [vmem:[%s1 + $0x2c] sm:$0xf]
      %v225 = vld [vmem:[%s1 + $0x30] sm:$0xf]
      %v226 = vld [vmem:[%s1 + $0x34] sm:$0xf]
      %v227 = vld [vmem:[%s1 + $0x38] sm:$0xf]
      %v228 = vld [vmem:[%s1 + $0x3c] sm:$0xf]
      %v229 = vld [vmem:[%s1 + $0x40] sm:$0xf]
      %v230 = vld [vmem:[%s1 + $0x44] sm:$0xf]
      %v231 = vld [vmem:[%s1 + $0x48] sm:$0xf]
      %v232 = vld [vmem:[%s1 + $0x4c] sm:$0xf]
      %v233 = vld [vmem:[%s1 + $0x50] sm:$0xf]
      %v234 = vld [vmem:[%s1 + $0x54] sm:$0xf]
      %v235 = vld [vmem:[%s1 + $0x58] sm:$0xf]
      %v236 = vld [vmem:[%s1 + $0x5c] sm:$0xf]
      %v237 = vld [vmem:[%s1 + $0x60] sm:$0xf]
      %v238 = vld [vmem:[%s1 + $0x64] sm:$0xf]
      %v239 = vld [vmem:[%s1 + $0x68] sm:$0xf]
      %v240 = vld [vmem:[%s1 + $0x6c] sm:$0xf]
      %v241 = vld [vmem:[%s1 + $0x70] sm:$0xf]
      %v242 = vld [vmem:[%s1 + $0x74] sm:$0xf]
      %v243 = vld [vmem:[%s1 + $0x78] sm:$0xf]
      %v244 = vld [vmem:[%s1 + $0x7c] sm:$0xf]
      %v253 = vunpack.c.l.b16 %v205
      %v254 = vunpack.c.h.b16 %v205
      %v255 = vunpack.c.l.b16 %v206
      %v256 = vunpack.c.h.b16 %v206
      %v257 = vunpack.c.l.b16 %v207
      %v258 = vunpack.c.h.b16 %v207
      %v259 = vunpack.c.l.b16 %v208
      %v260 = vunpack.c.h.b16 %v208
      %v261 = vunpack.c.l.b16 %v209
      %v262 = vunpack.c.h.b16 %v209
      %v263 = vunpack.c.l.b16 %v210
      %v264 = vunpack.c.h.b16 %v210
      %v265 = vunpack.c.l.b16 %v211
      %v266 = vunpack.c.h.b16 %v211
      %v267 = vunpack.c.l.b16 %v212
      %v268 = vunpack.c.h.b16 %v212
      %v269 = vpack.c.b16 %v255, %v253
      %v270 = vpack.c.b16 %v256, %v254
      %v271 = vpack.c.b16 %v259, %v257
      %v272 = vpack.c.b16 %v260, %v258
      %v273 = vpack.c.b16 %v263, %v261
      %v274 = vpack.c.b16 %v264, %v262
      %v275 = vpack.c.b16 %v267, %v265
      %v276 = vpack.c.b16 %v268, %v266
      %v317 = vunpack.c.l.b16 %v213
      %v318 = vunpack.c.l.b16 %v214
      %v319 = vunpack.c.l.b16 %v215
      %v320 = vunpack.c.l.b16 %v216
      %v321 = vunpack.c.l.b16 %v217
      %v322 = vunpack.c.l.b16 %v218
      %v323 = vunpack.c.l.b16 %v219
      %v324 = vunpack.c.l.b16 %v220
      %v325 = vunpack.c.l.b16 %v221
      %v326 = vunpack.c.l.b16 %v222
      %v327 = vunpack.c.l.b16 %v223
      %v328 = vunpack.c.l.b16 %v224
      %v329 = vunpack.c.l.b16 %v225
      %v330 = vunpack.c.l.b16 %v226
      %v331 = vunpack.c.l.b16 %v227
      %v332 = vunpack.c.l.b16 %v228
      %v333 = vunpack.c.l.b16 %v229
      %v334 = vunpack.c.l.b16 %v230
      %v335 = vunpack.c.l.b16 %v231
      %v336 = vunpack.c.l.b16 %v232
      %v337 = vunpack.c.l.b16 %v233
      %v338 = vunpack.c.l.b16 %v234
      %v339 = vunpack.c.l.b16 %v235
      %v340 = vunpack.c.l.b16 %v236
      %v341 = vunpack.c.l.b16 %v237
      %v342 = vunpack.c.l.b16 %v238
      %v343 = vunpack.c.l.b16 %v239
      %v344 = vunpack.c.l.b16 %v240
      %v345 = vunpack.c.l.b16 %v241
      %v346 = vunpack.c.l.b16 %v242
      %v347 = vunpack.c.l.b16 %v243
      %v348 = vunpack.c.l.b16 %v244
      %v349 = vpack.c.b16 %v318, %v317
      %v350 = vpack.c.b16 %v320, %v319
      %v351 = vpack.c.b16 %v322, %v321
      %v352 = vpack.c.b16 %v324, %v323
      %v353 = vpack.c.b16 %v326, %v325
      %v354 = vpack.c.b16 %v328, %v327
      %v355 = vpack.c.b16 %v330, %v329
      %v356 = vpack.c.b16 %v332, %v331
      %v357 = vpack.c.b16 %v334, %v333
      %v358 = vpack.c.b16 %v336, %v335
      %v359 = vpack.c.b16 %v338, %v337
      %v360 = vpack.c.b16 %v340, %v339
      %v361 = vpack.c.b16 %v342, %v341
      %v362 = vpack.c.b16 %v344, %v343
      %v363 = vpack.c.b16 %v346, %v345
      %v364 = vpack.c.b16 %v348, %v347
      %381 = vmatprep.subr.bf16.mxu0 0
      %382 = vmatpush1.bf16.msra.mxu0 %v349
      %383 = vmatprep.subr.bf16.mxu0 0
      %384 = vmatpush1.bf16.msra.mxu0 %v350
      %385 = vmatprep.subr.bf16.mxu0 0
      %386 = vmatpush1.bf16.msra.mxu0 %v351
      %387 = vmatprep.subr.bf16.mxu0 0
      %388 = vmatpush1.bf16.msra.mxu0 %v352
      %389 = vmatprep.subr.bf16.mxu0 0
      %390 = vmatpush1.bf16.msra.mxu0 %v353
      %391 = vmatprep.subr.bf16.mxu0 0
      %392 = vmatpush1.bf16.msra.mxu0 %v354
      %393 = vmatprep.subr.bf16.mxu0 0
      %394 = vmatpush1.bf16.msra.mxu0 %v355
      %395 = vmatprep.subr.bf16.mxu0 0
      %396 = vmatpush1.bf16.msra.mxu0 %v356
      %397 = vmatprep.subr.bf16.mxu0 0
      %398 = vmatpush1.bf16.msra.mxu0 %v357
      %399 = vmatprep.subr.bf16.mxu0 0
      %400 = vmatpush1.bf16.msra.mxu0 %v358
      %401 = vmatprep.subr.bf16.mxu0 0
      %402 = vmatpush1.bf16.msra.mxu0 %v359
      %403 = vmatprep.subr.bf16.mxu0 0
      %404 = vmatpush1.bf16.msra.mxu0 %v360
      %405 = vmatprep.subr.bf16.mxu0 0
      %406 = vmatpush1.bf16.msra.mxu0 %v361
      %407 = vmatprep.subr.bf16.mxu0 0
      %408 = vmatpush1.bf16.msra.mxu0 %v362
      %409 = vmatprep.subr.bf16.mxu0 0
      %410 = vmatpush1.bf16.msra.mxu0 %v363
      %411 = vmatprep.subr.bf16.mxu0 0
      %412 = vmatpush1.bf16.msra.mxu0 %v364
      %413 = vmatprep.mubr.bf16.mxu0 %v270
      %414 = vmatmul.mubr.bf16.gmra.mrb[0].mxu0 %v269
      %v415 = vpop.f32.mrb[0].mxu0
      %v416 = vadd.f32 0.0, %v415
      %v417 = vpop.f32.mrb[0].mxu0
      %v418 = vpop.f32.mrb[0].mxu0
      %v419 = vadd.f32 0.0, %v418
      %v420 = vpop.f32.mrb[0].mxu0
      %421 = vmatprep.mubr.bf16.mxu0 %v272
      %422 = vmatmul.mubr.bf16.gmra.mrb[0].mxu0 %v271
      %v423 = vpop.f32.mrb[0].mxu0
      %v424 = vadd.f32 0.0, %v423
      %v425 = vpop.f32.mrb[0].mxu0
      %v426 = vpop.f32.mrb[0].mxu0
      %v427 = vadd.f32 0.0, %v426
      %v428 = vpop.f32.mrb[0].mxu0
      %429 = vmatprep.mubr.bf16.mxu0 %v274
      %430 = vmatmul.mubr.bf16.gmra.mrb[0].mxu0 %v273
      %v431 = vpop.f32.mrb[0].mxu0
      %v432 = vadd.f32 0.0, %v431
      %v433 = vpop.f32.mrb[0].mxu0
      %v434 = vpop.f32.mrb[0].mxu0
      %v435 = vadd.f32 0.0, %v434
      %v436 = vpop.f32.mrb[0].mxu0
      %437 = vmatprep.mubr.bf16.mxu0 %v276
      %438 = vmatmul.mubr.bf16.gmra.mrb[0].mxu0 %v275
      %v439 = vpop.f32.mrb[0].mxu0
      %v440 = vadd.f32 0.0, %v439
      %v441 = vpop.f32.mrb[0].mxu0
      %v442 = vpop.f32.mrb[0].mxu0
      %v443 = vadd.f32 0.0, %v442
      %v444 = vpop.f32.mrb[0].mxu0
      %445 = vdwg.mxu0
      %v446 = vld [vmem:[%s2] sm:$0x1]
      %v448 = vlaneseq
      %v449 = vshrl.u32 %v448, 7
      %v450 = vsub.s32 0, %v449
      %v451 = vrot.slane %v446, %v450
      %v453 = vmul.f32 %v416, %v451
      %v454 = vmul.f32 %v419, %v451
      %v455 = vmul.f32 %v424, %v451
      %v456 = vmul.f32 %v427, %v451
      %v457 = vmul.f32 %v432, %v451
      %v458 = vmul.f32 %v435, %v451
      %v459 = vmul.f32 %v440, %v451
      %v460 = vmul.f32 %v443, %v451
      %v461 = vld [vmem:[%s3] sm:$0x1]
      %v463 = vlaneseq
      %v464 = vshrl.u32 %v463, 7
      %v465 = vsub.s32 0, %v464
      %v466 = vrot.slane %v461, %v465
      %v468 = vadd.f32 %v453, %v466
      %v469 = vadd.f32 %v454, %v466
      %v470 = vadd.f32 %v455, %v466
      %v471 = vadd.f32 %v456, %v466
      %v472 = vadd.f32 %v457, %v466
      %v473 = vadd.f32 %v458, %v466
      %v474 = vadd.f32 %v459, %v466
      %v475 = vadd.f32 %v460, %v466
      %v476 = vmax.f32 %v468, 0.0
      %v477 = vmax.f32 %v469, 0.0
      %v478 = vmax.f32 %v470, 0.0
      %v479 = vmax.f32 %v471, 0.0
      %v480 = vmax.f32 %v472, 0.0
      %v481 = vmax.f32 %v473, 0.0
      %v482 = vmax.f32 %v474, 0.0
      %v483 = vmax.f32 %v475, 0.0
      %484 = vst [vmem:[%s202] sm:$0xff] %v476
      %485 = vst [vmem:[%s202 + $0x8] sm:$0xff] %v477
      %486 = vst [vmem:[%s202 + $0x10] sm:$0xff] %v478
      %487 = vst [vmem:[%s202 + $0x18] sm:$0xff] %v479
      %488 = vst [vmem:[%s202 + $0x20] sm:$0xff] %v480
      %489 = vst [vmem:[%s202 + $0x28] sm:$0xff] %v481
      %490 = vst [vmem:[%s202 + $0x30] sm:$0xff] %v482
      %491 = vst [vmem:[%s202 + $0x38] sm:$0xff] %v483
      %s492 = smul.u32 8, %s15
      %p493 = scmp.lt.s32.totalorder %s492, 15
      %s494 = scalar_select %p493, %s492, 15
      %s495 = smul.addr %s494, 8
      %s496 = scalar_lea.vmem %s4, %s495
      // Predicated region
      $region37: #{feature_extraction_forward.4} parent=35 // pred_check
        %p497 = pneg %p122
      $region38: #{feature_extraction_forward.4} parent=35 // pred_check_branch
        %499 = sbr.rel (%p497) target = $region40
      $region39: #{feature_extraction_forward.4} parent=35 // pred_region
        %s500 = smul.u32 8, %s15
      $region40: #{feature_extraction_forward.4} parent=35 // pred_fallthru
        _
    $region36: #{feature_extraction_forward.4} parent=5 // pred_fallthru
      _
    %p501 = scmp.le.s32.totalorder 2, %s10
    // Predicated region
    $region41: #{feature_extraction_forward.4} parent=5 // pred_check
      %p502 = pneg %p501
    $region42: #{feature_extraction_forward.4} parent=5 // pred_check_branch
      %504 = sbr.rel (%p502) target = $region44
    $region43: #{feature_extraction_forward.4} parent=5 // pred_region
      %s505 = ssub.s32 %s10, 2
      // Predicated region
      $region45: #{feature_extraction_forward.4} parent=43 // pred_check
        %p506 = pneg %p128
      $region46: #{feature_extraction_forward.4} parent=43 // pred_check_branch
        %508 = sbr.rel (%p506) target = $region48
      $region47: #{feature_extraction_forward.4} parent=43 // pred_region
        %s509 = smul.u32 8, %s16
        %p510 = scmp.lt.s32.totalorder %s509, 15
        %s511 = scalar_select %p510, %s509, 15
        %s512 = smul.addr %s511, 8
        %s513 = scalar_lea.vmem %s4, %s512
      $region48: #{feature_extraction_forward.4} parent=43 // pred_fallthru
        _
    $region44: #{feature_extraction_forward.4} parent=5 // pred_fallthru
      _
  $region6: #{feature_extraction_forward.4} parent=0 // loop_footer
    %s14 = sadd.s32 1, %s10
  $region7: #{feature_extraction_forward.4} parent=0 // loop_footer_branch
    %9 = sbr.rel target = $region3
  $region8: #{feature_extraction_forward.4} parent=0 // loop_exit
    _

// kernel: feature_extraction_forward.5
$region0: #{feature_extraction_forward.5}
  #allocation0 [shape = 'u32[]', space=smem, size = 0x4, offset = 0x4, fixed_abs, tag = 'smem constant byte address 0x4 - core index']
  #allocation1 [shape = 'u32[144,128]{1,0:T(1,128)}', space=vmem, size = 0x12000, scoped, tag = 'internal scratch']
  %s0 = inlined_call_operand.vmem [shape: bf16[2,8,128], index: 0, kind: input, shape index: {}]
  %s1 = inlined_call_operand.vmem [shape: bf16[2,128,384], index: 1, kind: input, shape index: {}]
  %s2 = inlined_call_operand.vmem [shape: f32[2,1,384], index: 2, kind: input, shape index: {}]
  %s3 = inlined_call_operand.vmem [shape: bf16[2,128,384], index: 3, kind: input, shape index: {}]
  %s4 = inlined_call_operand.vmem [shape: f32[2,1,384], index: 4, kind: input, shape index: {}]
  %s5 = inlined_call_operand.vmem [shape: f32[2,2,128], index: 5, kind: output, shape index: {}]
  %s6 = sld [smem:[#allocation0]]
  $region53: #{feature_extraction_forward.5} parent=0
    _
  %s8 = ssub.s32 1, %s6
  %s9 = scalar_select 0, %s8, %s6
  loop: start=0, step=1, limit=4
  $region2: #{feature_extraction_forward.5} parent=0 // loop_pre_header
    _
  $region3: #{feature_extraction_forward.5} parent=0 // loop_header
    %s11 = sphi 0, %s15
    %p12 = scmp.ge.s32.totalorder %s11, 4
    %s21 = sphi 0, %s23
    %s24 = sphi 0, %s21
    %s25 = sphi 0, %s24
    %s41 = sphi 0, %s25
    %s47 = sphi 0, %s49
    %s50 = sphi 0, %s47
    %s51 = sphi 0, %s50
    %s67 = sphi 0, %s51
    %s73 = sphi 0, %s75
    %s76 = sphi 0, %s73
    %s77 = sphi 0, %s76
    %s93 = sphi 0, %s77
    %s99 = sphi 0, %s101
    %s102 = sphi 0, %s99
    %s103 = sphi 0, %s102
    %s119 = sphi 0, %s103
    %s125 = sphi 0, %s127
    %s128 = sphi 0, %s125
    %s129 = sphi 0, %s128
    %s145 = sphi 0, %s129
    %s151 = sphi 0, %s153
    %s154 = sphi 0, %s151
    %s155 = sphi 0, %s154
    %s171 = sphi 0, %s155
  $region4: #{feature_extraction_forward.5} parent=0 // loop_header_branch
    %14 = sbr.rel (%p12) target = $region8
  $region5: #{feature_extraction_forward.5} parent=0 // loop_body
    %s16 = ssub.s32 %s11, 1
    %s17 = ssub.s32 %s11, 2
    %s18 = sadd.s32 %s11, 1
    %s19 = ssub.s32 %s11, %s18
    %p20 = scmp.eq.s32.totalorder %s19, 0
    %s22 = sadd.s32 %s21, 1
    %s23 = scalar_select %p20, %s21, %s22
    %p26 = pneg %p20
    %p27 = scmp.eq.s32.totalorder %s11, 1
    %p28 = por %p26, %p27
    %p29 = scmp.ne.s32.totalorder %s21, %s24
    %p30 = scmp.eq.s32.totalorder %s11, 0
    %p31 = por %p29, %p30
    %p32 = scmp.ne.s32.totalorder %s21, %s24
    %p33 = scmp.eq.s32.totalorder %s16, 1
    %p34 = por %p32, %p33
    %p35 = scmp.ne.s32.totalorder %s24, %s25
    %p36 = scmp.eq.s32.totalorder %s16, 0
    %p37 = por %p35, %p36
    %p38 = scmp.ne.s32.totalorder %s24, %s25
    %p39 = scmp.eq.s32.totalorder %s17, 1
    %p40 = por %p38, %p39
    %p42 = scmp.ne.s32.totalorder %s25, %s41
    %p43 = scmp.eq.s32.totalorder %s17, 0
    %p44 = por %p42, %p43
    %s45 = ssub.s32 %s11, %s18
    %p46 = scmp.eq.s32.totalorder %s45, 0
    %s48 = sadd.s32 %s47, 1
    %s49 = scalar_select %p46, %s47, %s48
    %p52 = pneg %p46
    %p53 = scmp.eq.s32.totalorder %s11, 1
    %p54 = por %p52, %p53
    %p55 = scmp.ne.s32.totalorder %s47, %s50
    %p56 = scmp.eq.s32.totalorder %s11, 0
    %p57 = por %p55, %p56
    %p58 = scmp.ne.s32.totalorder %s47, %s50
    %p59 = scmp.eq.s32.totalorder %s16, 1
    %p60 = por %p58, %p59
    %p61 = scmp.ne.s32.totalorder %s50, %s51
    %p62 = scmp.eq.s32.totalorder %s16, 0
    %p63 = por %p61, %p62
    %p64 = scmp.ne.s32.totalorder %s50, %s51
    %p65 = scmp.eq.s32.totalorder %s17, 1
    %p66 = por %p64, %p65
    %p68 = scmp.ne.s32.totalorder %s51, %s67
    %p69 = scmp.eq.s32.totalorder %s17, 0
    %p70 = por %p68, %p69
    %s71 = ssub.s32 %s11, %s18
    %p72 = scmp.eq.s32.totalorder %s71, 0
    %s74 = sadd.s32 %s73, 1
    %s75 = scalar_select %p72, %s73, %s74
    %p78 = pneg %p72
    %p79 = scmp.eq.s32.totalorder %s11, 1
    %p80 = por %p78, %p79
    %p81 = scmp.ne.s32.totalorder %s73, %s76
    %p82 = scmp.eq.s32.totalorder %s11, 0
    %p83 = por %p81, %p82
    %p84 = scmp.ne.s32.totalorder %s73, %s76
    %p85 = scmp.eq.s32.totalorder %s16, 1
    %p86 = por %p84, %p85
    %p87 = scmp.ne.s32.totalorder %s76, %s77
    %p88 = scmp.eq.s32.totalorder %s16, 0
    %p89 = por %p87, %p88
    %p90 = scmp.ne.s32.totalorder %s76, %s77
    %p91 = scmp.eq.s32.totalorder %s17, 1
    %p92 = por %p90, %p91
    %p94 = scmp.ne.s32.totalorder %s77, %s93
    %p95 = scmp.eq.s32.totalorder %s17, 0
    %p96 = por %p94, %p95
    %s97 = ssub.s32 %s11, %s18
    %p98 = scmp.eq.s32.totalorder %s97, 0
    %s100 = sadd.s32 %s99, 1
    %s101 = scalar_select %p98, %s99, %s100
    %p104 = pneg %p98
    %p105 = scmp.eq.s32.totalorder %s11, 1
    %p106 = por %p104, %p105
    %p107 = scmp.ne.s32.totalorder %s99, %s102
    %p108 = scmp.eq.s32.totalorder %s11, 0
    %p109 = por %p107, %p108
    %p110 = scmp.ne.s32.totalorder %s99, %s102
    %p111 = scmp.eq.s32.totalorder %s16, 1
    %p112 = por %p110, %p111
    %p113 = scmp.ne.s32.totalorder %s102, %s103
    %p114 = scmp.eq.s32.totalorder %s16, 0
    %p115 = por %p113, %p114
    %p116 = scmp.ne.s32.totalorder %s102, %s103
    %p117 = scmp.eq.s32.totalorder %s17, 1
    %p118 = por %p116, %p117
    %p120 = scmp.ne.s32.totalorder %s103, %s119
    %p121 = scmp.eq.s32.totalorder %s17, 0
    %p122 = por %p120, %p121
    %s123 = ssub.s32 %s11, %s18
    %p124 = scmp.eq.s32.totalorder %s123, 0
    %s126 = sadd.s32 %s125, 1
    %s127 = scalar_select %p124, %s125, %s126
    %p130 = pneg %p124
    %p131 = scmp.eq.s32.totalorder %s11, 1
    %p132 = por %p130, %p131
    %p133 = scmp.ne.s32.totalorder %s125, %s128
    %p134 = scmp.eq.s32.totalorder %s11, 0
    %p135 = por %p133, %p134
    %p136 = scmp.ne.s32.totalorder %s125, %s128
    %p137 = scmp.eq.s32.totalorder %s16, 1
    %p138 = por %p136, %p137
    %p139 = scmp.ne.s32.totalorder %s128, %s129
    %p140 = scmp.eq.s32.totalorder %s16, 0
    %p141 = por %p139, %p140
    %p142 = scmp.ne.s32.totalorder %s128, %s129
    %p143 = scmp.eq.s32.totalorder %s17, 1
    %p144 = por %p142, %p143
    %p146 = scmp.ne.s32.totalorder %s129, %s145
    %p147 = scmp.eq.s32.totalorder %s17, 0
    %p148 = por %p146, %p147
    %s149 = ssub.s32 %s11, %s18
    %p150 = scmp.eq.s32.totalorder %s149, 0
    %s152 = sadd.s32 %s151, 1
    %s153 = scalar_select %p150, %s151, %s152
    %p156 = pneg %p150
    %p157 = scmp.eq.s32.totalorder %s11, 1
    %p158 = por %p156, %p157
    %p159 = scmp.ne.s32.totalorder %s151, %s154
    %p160 = scmp.eq.s32.totalorder %s11, 0
    %p161 = por %p159, %p160
    %p162 = scmp.ne.s32.totalorder %s151, %s154
    %p163 = scmp.eq.s32.totalorder %s16, 1
    %p164 = por %p162, %p163
    %p165 = scmp.ne.s32.totalorder %s154, %s155
    %p166 = scmp.eq.s32.totalorder %s16, 0
    %p167 = por %p165, %p166
    %p168 = scmp.ne.s32.totalorder %s154, %s155
    %p169 = scmp.eq.s32.totalorder %s17, 1
    %p170 = por %p168, %p169
    %p172 = scmp.ne.s32.totalorder %s155, %s171
    %p173 = scmp.eq.s32.totalorder %s17, 0
    %p174 = por %p172, %p173
    %p175 = scmp.le.s32.totalorder 1, %s11
    %p176 = scmp.lt.s32.totalorder %s11, 3
    %p177 = pnand %p175, %p176
    %p178 = pneg %p177
    // Predicated region
    $region9: #{feature_extraction_forward.5} parent=5 // pred_check
      _
    $region10: #{feature_extraction_forward.5} parent=5 // pred_check_branch
      %180 = sbr.rel (%p177) target = $region12
    $region11: #{feature_extraction_forward.5} parent=5 // pred_region
      %s181 = ssub.s32 %s11, 1
    $region12: #{feature_extraction_forward.5} parent=5 // pred_fallthru
      _
    %p182 = scmp.lt.s32.totalorder %s11, 2
    // Predicated region
    $region13: #{feature_extraction_forward.5} parent=5 // pred_check
      %p183 = pneg %p182
    $region14: #{feature_extraction_forward.5} parent=5 // pred_check_branch
      %185 = sbr.rel (%p183) target = $region16
    $region15: #{feature_extraction_forward.5} parent=5 // pred_region
      // Predicated region
      $region17: #{feature_extraction_forward.5} parent=15 // pred_check
        %p186 = pneg %p31
      $region18: #{feature_extraction_forward.5} parent=15 // pred_check_branch
        %188 = sbr.rel (%p186) target = $region20
      $region19: #{feature_extraction_forward.5} parent=15 // pred_region
        %p189 = scmp.lt.s32.totalorder %s11, 1
        %s190 = scalar_select %p189, %s11, 1
        %s191 = smul.addr %s190, 4
        %s192 = scalar_lea.vmem %s0, %s191
      $region20: #{feature_extraction_forward.5} parent=15 // pred_fallthru
        _
      // Predicated region
      $region21: #{feature_extraction_forward.5} parent=15 // pred_check
        %p193 = pneg %p57
      $region22: #{feature_extraction_forward.5} parent=15 // pred_check_branch
        %195 = sbr.rel (%p193) target = $region24
      $region23: #{feature_extraction_forward.5} parent=15 // pred_region
        %p196 = scmp.lt.s32.totalorder %s11, 1
        %s197 = scalar_select %p196, %s11, 1
        %s198 = smul.addr %s197, 48
        %s199 = smul.addr %s198, 4
        %s200 = scalar_lea.vmem %s1, %s199
      $region24: #{feature_extraction_forward.5} parent=15 // pred_fallthru
        _
      // Predicated region
      $region25: #{feature_extraction_forward.5} parent=15 // pred_check
        %p201 = pneg %p83
      $region26: #{feature_extraction_forward.5} parent=15 // pred_check_branch
        %203 = sbr.rel (%p201) target = $region28
      $region27: #{feature_extraction_forward.5} parent=15 // pred_region
        %p204 = scmp.lt.s32.totalorder %s11, 1
        %s205 = scalar_select %p204, %s11, 1
        %s206 = smul.addr %s205, 3
        %s207 = scalar_lea.vmem %s2, %s206
      $region28: #{feature_extraction_forward.5} parent=15 // pred_fallthru
        _
      // Predicated region
      $region29: #{feature_extraction_forward.5} parent=15 // pred_check
        %p208 = pneg %p109
      $region30: #{feature_extraction_forward.5} parent=15 // pred_check_branch
        %210 = sbr.rel (%p208) target = $region32
      $region31: #{feature_extraction_forward.5} parent=15 // pred_region
        %p211 = scmp.lt.s32.totalorder %s11, 1
        %s212 = scalar_select %p211, %s11, 1
        %s213 = smul.addr %s212, 48
        %s214 = smul.addr %s213, 4
        %s215 = scalar_lea.vmem %s3, %s214
      $region32: #{feature_extraction_forward.5} parent=15 // pred_fallthru
        _
      // Predicated region
      $region33: #{feature_extraction_forward.5} parent=15 // pred_check
        %p216 = pneg %p135
      $region34: #{feature_extraction_forward.5} parent=15 // pred_check_branch
        %218 = sbr.rel (%p216) target = $region36
      $region35: #{feature_extraction_forward.5} parent=15 // pred_region
        %p219 = scmp.lt.s32.totalorder %s11, 1
        %s220 = scalar_select %p219, %s11, 1
        %s221 = smul.addr %s220, 3
        %s222 = scalar_lea.vmem %s4, %s221
      $region36: #{feature_extraction_forward.5} parent=15 // pred_fallthru
        _
    $region16: #{feature_extraction_forward.5} parent=5 // pred_fallthru
      _
    %p223 = scmp.le.s32.totalorder 1, %s11
    %p224 = scmp.lt.s32.totalorder %s11, 3
    %p225 = pnand %p223, %p224
    %p226 = pneg %p225
    // Predicated region
    $region37: #{feature_extraction_forward.5} parent=5 // pred_check
      _
    $region38: #{feature_extraction_forward.5} parent=5 // pred_check_branch
      %228 = sbr.rel (%p225) target = $region40
    $region39: #{feature_extraction_forward.5} parent=5 // pred_region
      %s229 = ssub.s32 %s11, 1
      %p230 = scmp.lt.s32.totalorder %s16, 1
      %s231 = scalar_select %p230, %s16, 1
      %s232 = smul.addr %s231, 4
      %s233 = scalar_lea.vmem %s0, %s232
      %p234 = pneg %p37
      %p235 = pneg %p34
      %p236 = scmp.lt.s32.totalorder %s16, 1
      %s237 = scalar_select %p236, %s16, 1
      %s238 = smul.addr %s237, 48
      %s239 = smul.addr %s238, 4
      %s240 = scalar_lea.vmem %s1, %s239
      %p241 = pneg %p63
      %p242 = pneg %p60
      %p243 = scmp.lt.s32.totalorder %s16, 1
      %s244 = scalar_select %p243, %s16, 1
      %s245 = smul.addr %s244, 3
      %s246 = scalar_lea.vmem %s2, %s245
      %p247 = pneg %p89
      %p248 = pneg %p86
      %p249 = scmp.lt.s32.totalorder %s16, 1
      %s250 = scalar_select %p249, %s16, 1
      %s251 = smul.addr %s250, 48
      %s252 = smul.addr %s251, 4
      %s253 = scalar_lea.vmem %s3, %s252
      %p254 = pneg %p115
      %p255 = pneg %p112
      %p256 = scmp.lt.s32.totalorder %s16, 1
      %s257 = scalar_select %p256, %s16, 1
      %s258 = smul.addr %s257, 3
      %s259 = scalar_lea.vmem %s4, %s258
      %p260 = pneg %p141
      %p261 = pneg %p138
      %p262 = pneg %p167
      %p263 = pneg %p164
      %p264 = scmp.lt.s32.totalorder %s16, 1
      %s265 = scalar_select %p264, %s16, 1
      %s266 = smul.addr %s265, 2
      %s267 = scalar_lea.vmem %s5, %s266
      %p268 = scmp.lt.s32.totalorder %s16, 1
      %s269 = scalar_select %p268, %s16, 1
      %s270 = smul.addr %s269, 4
      %s271 = scalar_lea.vmem %s0, %s270
      %p272 = scmp.lt.s32.totalorder %s16, 1
      %s273 = scalar_select %p272, %s16, 1
      %s274 = smul.addr %s273, 48
      %s275 = smul.addr %s274, 4
      %s276 = scalar_lea.vmem %s1, %s275
      %p277 = scmp.lt.s32.totalorder %s16, 1
      %s278 = scalar_select %p277, %s16, 1
      %s279 = smul.addr %s278, 3
      %s280 = scalar_lea.vmem %s2, %s279
      %p281 = scmp.lt.s32.totalorder %s16, 1
      %s282 = scalar_select %p281, %s16, 1
      %s283 = smul.addr %s282, 48
      %s284 = smul.addr %s283, 4
      %s285 = scalar_lea.vmem %s3, %s284
      %p286 = scmp.lt.s32.totalorder %s16, 1
      %s287 = scalar_select %p286, %s16, 1
      %s288 = smul.addr %s287, 3
      %s289 = scalar_lea.vmem %s4, %s288
      %p290 = scmp.lt.s32.totalorder %s16, 1
      %s291 = scalar_select %p290, %s16, 1
      %s292 = smul.addr %s291, 2
      %s293 = scalar_lea.vmem %s5, %s292
      %v295 = vld [vmem:[%s271] sm:$0xf]
      %v296 = vld [vmem:[%s276] sm:$0xff]
      %v297 = vld [vmem:[%s276 + $0x8] sm:$0xf]
      %v298 = vld [vmem:[%s276 + $0xc] sm:$0xff]
      %v299 = vld [vmem:[%s276 + $0x14] sm:$0xf]
      %v300 = vld [vmem:[%s276 + $0x18] sm:$0xff]
      %v301 = vld [vmem:[%s276 + $0x20] sm:$0xf]
      %v302 = vld [vmem:[%s276 + $0x24] sm:$0xff]
      %v303 = vld [vmem:[%s276 + $0x2c] sm:$0xf]
      %v304 = vld [vmem:[%s276 + $0x30] sm:$0xff]
      %v305 = vld [vmem:[%s276 + $0x38] sm:$0xf]
      %v306 = vld [vmem:[%s276 + $0x3c] sm:$0xff]
      %v307 = vld [vmem:[%s276 + $0x44] sm:$0xf]
      %v308 = vld [vmem:[%s276 + $0x48] sm:$0xff]
      %v309 = vld [vmem:[%s276 + $0x50] sm:$0xf]
      %v310 = vld [vmem:[%s276 + $0x54] sm:$0xff]
      %v311 = vld [vmem:[%s276 + $0x5c] sm:$0xf]
      %v312 = vld [vmem:[%s276 + $0x60] sm:$0xff]
      %v313 = vld [vmem:[%s276 + $0x68] sm:$0xf]
      %v314 = vld [vmem:[%s276 + $0x6c] sm:$0xff]
      %v315 = vld [vmem:[%s276 + $0x74] sm:$0xf]
      %v316 = vld [vmem:[%s276 + $0x78] sm:$0xff]
      %v317 = vld [vmem:[%s276 + $0x80] sm:$0xf]
      %v318 = vld [vmem:[%s276 + $0x84] sm:$0xff]
      %v319 = vld [vmem:[%s276 + $0x8c] sm:$0xf]
      %v320 = vld [vmem:[%s276 + $0x90] sm:$0xff]
      %v321 = vld [vmem:[%s276 + $0x98] sm:$0xf]
      %v322 = vld [vmem:[%s276 + $0x9c] sm:$0xff]
      %v323 = vld [vmem:[%s276 + $0xa4] sm:$0xf]
      %v324 = vld [vmem:[%s276 + $0xa8] sm:$0xff]
      %v325 = vld [vmem:[%s276 + $0xb0] sm:$0xf]
      %v326 = vld [vmem:[%s276 + $0xb4] sm:$0xff]
      %v327 = vld [vmem:[%s276 + $0xbc] sm:$0xf]
      %v328 = vld [vmem:[%s285] sm:$0xff]
      %v329 = vld [vmem:[%s285 + $0x8] sm:$0xf]
      %v330 = vld [vmem:[%s285 + $0xc] sm:$0xff]
      %v331 = vld [vmem:[%s285 + $0x14] sm:$0xf]
      %v332 = vld [vmem:[%s285 + $0x18] sm:$0xff]
      %v333 = vld [vmem:[%s285 + $0x20] sm:$0xf]
      %v334 = vld [vmem:[%s285 + $0x24] sm:$0xff]
      %v335 = vld [vmem:[%s285 + $0x2c] sm:$0xf]
      %v336 = vld [vmem:[%s285 + $0x30] sm:$0xff]
      %v337 = vld [vmem:[%s285 + $0x38] sm:$0xf]
      %v338 = vld [vmem:[%s285 + $0x3c] sm:$0xff]
      %v339 = vld [vmem:[%s285 + $0x44] sm:$0xf]
      %v340 = vld [vmem:[%s285 + $0x48] sm:$0xff]
      %v341 = vld [vmem:[%s285 + $0x50] sm:$0xf]
      %v342 = vld [vmem:[%s285 + $0x54] sm:$0xff]
      %v343 = vld [vmem:[%s285 + $0x5c] sm:$0xf]
      %v344 = vld [vmem:[%s285 + $0x60] sm:$0xff]
      %v345 = vld [vmem:[%s285 + $0x68] sm:$0xf]
      %v346 = vld [vmem:[%s285 + $0x6c] sm:$0xff]
      %v347 = vld [vmem:[%s285 + $0x74] sm:$0xf]
      %v348 = vld [vmem:[%s285 + $0x78] sm:$0xff]
      %v349 = vld [vmem:[%s285 + $0x80] sm:$0xf]
      %v350 = vld [vmem:[%s285 + $0x84] sm:$0xff]
      %v351 = vld [vmem:[%s285 + $0x8c] sm:$0xf]
      %v352 = vld [vmem:[%s285 + $0x90] sm:$0xff]
      %v353 = vld [vmem:[%s285 + $0x98] sm:$0xf]
      %v354 = vld [vmem:[%s285 + $0x9c] sm:$0xff]
      %v355 = vld [vmem:[%s285 + $0xa4] sm:$0xf]
      %v356 = vld [vmem:[%s285 + $0xa8] sm:$0xff]
      %v357 = vld [vmem:[%s285 + $0xb0] sm:$0xf]
      %v358 = vld [vmem:[%s285 + $0xb4] sm:$0xff]
      %v359 = vld [vmem:[%s285 + $0xbc] sm:$0xf]
      %v360 = vld [vmem:[%s280] sm:$0x7]
      %v361 = vld [vmem:[%s289] sm:$0x7]
      %v363 = vlaneseq
      %v364 = vshrl.u32 %v363, 7
      %v365 = vsub.s32 0, %v364
      %v366 = vrot.slane %v360, %v365
      %v367 = vlaneseq
      %v368 = vshrl.u32 %v367, 7
      %v369 = vsub.s32 1, %v368
      %v370 = vrot.slane %v360, %v369
      %v371 = vlaneseq
      %v372 = vshrl.u32 %v371, 7
      %v373 = vsub.s32 2, %v372
      %v374 = vrot.slane %v360, %v373
      %v410 = vunpack.c.l.b16 %v296
      %v411 = vunpack.c.h.b16 %v296
      %v412 = vunpack.c.l.b16 %v297
      %v413 = vunpack.c.l.b16 %v298
      %v414 = vunpack.c.h.b16 %v298
      %v415 = vunpack.c.l.b16 %v299
      %v416 = vunpack.c.l.b16 %v300
      %v417 = vunpack.c.h.b16 %v300
      %v418 = vunpack.c.l.b16 %v301
      %v419 = vunpack.c.l.b16 %v302
      %v420 = vunpack.c.h.b16 %v302
      %v421 = vunpack.c.l.b16 %v303
      %v422 = vunpack.c.l.b16 %v304
      %v423 = vunpack.c.h.b16 %v304
      %v424 = vunpack.c.l.b16 %v305
      %v425 = vunpack.c.l.b16 %v306
      %v426 = vunpack.c.h.b16 %v306
      %v427 = vunpack.c.l.b16 %v307
      %v428 = vunpack.c.l.b16 %v308
      %v429 = vunpack.c.h.b16 %v308
      %v430 = vunpack.c.l.b16 %v309
      %v431 = vunpack.c.l.b16 %v310
      %v432 = vunpack.c.h.b16 %v310
      %v433 = vunpack.c.l.b16 %v311
      %v434 = vunpack.c.l.b16 %v312
      %v435 = vunpack.c.h.b16 %v312
      %v436 = vunpack.c.l.b16 %v313
      %v437 = vunpack.c.l.b16 %v314
      %v438 = vunpack.c.h.b16 %v314
      %v439 = vunpack.c.l.b16 %v315
      %v440 = vunpack.c.l.b16 %v316
      %v441 = vunpack.c.h.b16 %v316
      %v442 = vunpack.c.l.b16 %v317
      %v443 = vunpack.c.l.b16 %v318
      %v444 = vunpack.c.h.b16 %v318
      %v445 = vunpack.c.l.b16 %v319
      %v446 = vunpack.c.l.b16 %v320
      %v447 = vunpack.c.h.b16 %v320
      %v448 = vunpack.c.l.b16 %v321
      %v449 = vunpack.c.l.b16 %v322
      %v450 = vunpack.c.h.b16 %v322
      %v451 = vunpack.c.l.b16 %v323
      %v452 = vunpack.c.l.b16 %v324
      %v453 = vunpack.c.h.b16 %v324
      %v454 = vunpack.c.l.b16 %v325
      %v455 = vunpack.c.l.b16 %v326
      %v456 = vunpack.c.h.b16 %v326
      %v457 = vunpack.c.l.b16 %v327
      %v458 = vpack.c.b16 %v413, %v410
      %v459 = vpack.c.b16 %v414, %v411
      %v460 = vpack.c.b16 %v415, %v412
      %v461 = vpack.c.b16 %v419, %v416
      %v462 = vpack.c.b16 %v420, %v417
      %v463 = vpack.c.b16 %v421, %v418
      %v464 = vpack.c.b16 %v425, %v422
      %v465 = vpack.c.b16 %v426, %v423
      %v466 = vpack.c.b16 %v427, %v424
      %v467 = vpack.c.b16 %v431, %v428
      %v468 = vpack.c.b16 %v432, %v429
      %v469 = vpack.c.b16 %v433, %v430
      %v470 = vpack.c.b16 %v437, %v434
      %v471 = vpack.c.b16 %v438, %v435
      %v472 = vpack.c.b16 %v439, %v436
      %v473 = vpack.c.b16 %v443, %v440
      %v474 = vpack.c.b16 %v444, %v441
      %v475 = vpack.c.b16 %v445, %v442
      %v476 = vpack.c.b16 %v449, %v446
      %v477 = vpack.c.b16 %v450, %v447
      %v478 = vpack.c.b16 %v451, %v448
      %v479 = vpack.c.b16 %v455, %v452
      %v480 = vpack.c.b16 %v456, %v453
      %v481 = vpack.c.b16 %v457, %v454
      %506 = vmatprep.subr.bf16.mxu0 %v459
      %507 = vmatpush1.bf16.msra.mxu0 %v458
      %508 = vmatprep.subr.bf16.mxu0 %v462
      %509 = vmatpush1.bf16.msra.mxu0 %v461
      %510 = vmatprep.subr.bf16.mxu0 %v465
      %511 = vmatpush1.bf16.msra.mxu0 %v464
      %512 = vmatprep.subr.bf16.mxu0 %v468
      %513 = vmatpush1.bf16.msra.mxu0 %v467
      %514 = vmatprep.subr.bf16.mxu0 %v471
      %515 = vmatpush1.bf16.msra.mxu0 %v470
      %516 = vmatprep.subr.bf16.mxu0 %v474
      %517 = vmatpush1.bf16.msra.mxu0 %v473
      %518 = vmatprep.subr.bf16.mxu0 %v477
      %519 = vmatpush1.bf16.msra.mxu0 %v476
      %520 = vmatprep.subr.bf16.mxu0 %v480
      %521 = vmatpush1.bf16.msra.mxu0 %v479
      %522 = vmatprep.subr.bf16.mxu0 0
      %523 = vmatpush1.bf16.msra.mxu0 0
      %524 = vmatprep.subr.bf16.mxu0 0
      %525 = vmatpush1.bf16.msra.mxu0 0
      %526 = vmatprep.subr.bf16.mxu0 0
      %527 = vmatpush1.bf16.msra.mxu0 0
      %528 = vmatprep.subr.bf16.mxu0 0
      %529 = vmatpush1.bf16.msra.mxu0 0
      %530 = vmatprep.subr.bf16.mxu0 0
      %531 = vmatpush1.bf16.msra.mxu0 0
      %532 = vmatprep.subr.bf16.mxu0 0
      %533 = vmatpush1.bf16.msra.mxu0 0
      %534 = vmatprep.subr.bf16.mxu0 0
      %535 = vmatpush1.bf16.msra.mxu0 0
      %536 = vmatprep.subr.bf16.mxu0 0
      %537 = vmatpush1.bf16.msra.mxu0 0
      %538 = vmatprep.mubr.bf16.mxu0 0
      %539 = vmatmul.mubr.bf16.gmra.mrb[0].mxu0 %v295
      %v540 = vpop.f32.mrb[0].mxu0
      %v541 = vadd.f32 %v366, %v540
      %v542 = vpop.f32.mrb[0].mxu0
      %v543 = vadd.f32 %v370, %v542
      %v544 = vpop.f32.mrb[0].mxu0
      %v545 = vpop.f32.mrb[0].mxu0
      %546 = vdwg.mxu0
      %547 = vmatprep.subr.bf16.mxu0 0
      %548 = vmatpush1.bf16.msra.mxu0 %v460
      %549 = vmatprep.subr.bf16.mxu0 0
      %550 = vmatpush1.bf16.msra.mxu0 %v463
      %551 = vmatprep.subr.bf16.mxu0 0
      %552 = vmatpush1.bf16.msra.mxu0 %v466
      %553 = vmatprep.subr.bf16.mxu0 0
      %554 = vmatpush1.bf16.msra.mxu0 %v469
      %555 = vmatprep.subr.bf16.mxu0 0
      %556 = vmatpush1.bf16.msra.mxu0 %v472
      %557 = vmatprep.subr.bf16.mxu0 0
      %558 = vmatpush1.bf16.msra.mxu0 %v475
      %559 = vmatprep.subr.bf16.mxu0 0
      %560 = vmatpush1.bf16.msra.mxu0 %v478
      %561 = vmatprep.subr.bf16.mxu0 0
      %562 = vmatpush1.bf16.msra.mxu0 %v481
      %563 = vmatprep.subr.bf16.mxu0 0
      %564 = vmatpush1.bf16.msra.mxu0 0
      %565 = vmatprep.subr.bf16.mxu0 0
      %566 = vmatpush1.bf16.msra.mxu0 0
      %567 = vmatprep.subr.bf16.mxu0 0
      %568 = vmatpush1.bf16.msra.mxu0 0
      %569 = vmatprep.subr.bf16.mxu0 0
      %570 = vmatpush1.bf16.msra.mxu0 0
      %571 = vmatprep.subr.bf16.mxu0 0
      %572 = vmatpush1.bf16.msra.mxu0 0
      %573 = vmatprep.subr.bf16.mxu0 0
      %574 = vmatpush1.bf16.msra.mxu0 0
      %575 = vmatprep.subr.bf16.mxu0 0
      %576 = vmatpush1.bf16.msra.mxu0 0
      %577 = vmatprep.subr.bf16.mxu0 0
      %578 = vmatpush1.bf16.msra.mxu0 0
      %579 = vmatprep.mubr.bf16.mxu0 0
      %580 = vmatmul.mubr.bf16.gmra.mrb[0].mxu0 %v295
      %v581 = vpop.f32.mrb[0].mxu0
      %v582 = vadd.f32 %v374, %v581
      %v583 = vpop.f32.mrb[0].mxu0
      %v584 = vpop.f32.mrb[0].mxu0
      %v585 = vpop.f32.mrb[0].mxu0
      %586 = vdwg.mxu0
      %v588 = vlaneseq
      %v589 = vshrl.u32 %v588, 7
      %v590 = vsub.s32 0, %v589
      %v591 = vrot.slane %v361, %v590
      %v592 = vlaneseq
      %v593 = vshrl.u32 %v592, 7
      %v594 = vsub.s32 1, %v593
      %v595 = vrot.slane %v361, %v594
      %v596 = vlaneseq
      %v597 = vshrl.u32 %v596, 7
      %v598 = vsub.s32 2, %v597
      %v599 = vrot.slane %v361, %v598
      %v635 = vunpack.c.l.b16 %v328
      %v636 = vunpack.c.h.b16 %v328
      %v637 = vunpack.c.l.b16 %v329
      %v638 = vunpack.c.l.b16 %v330
      %v639 = vunpack.c.h.b16 %v330
      %v640 = vunpack.c.l.b16 %v331
      %v641 = vunpack.c.l.b16 %v332
      %v642 = vunpack.c.h.b16 %v332
      %v643 = vunpack.c.l.b16 %v333
      %v644 = vunpack.c.l.b16 %v334
      %v645 = vunpack.c.h.b16 %v334
      %v646 = vunpack.c.l.b16 %v335
      %v647 = vunpack.c.l.b16 %v336
      %v648 = vunpack.c.h.b16 %v336
      %v649 = vunpack.c.l.b16 %v337
      %v650 = vunpack.c.l.b16 %v338
      %v651 = vunpack.c.h.b16 %v338
      %v652 = vunpack.c.l.b16 %v339
      %v653 = vunpack.c.l.b16 %v340
      %v654 = vunpack.c.h.b16 %v340
      %v655 = vunpack.c.l.b16 %v341
      %v656 = vunpack.c.l.b16 %v342
      %v657 = vunpack.c.h.b16 %v342
      %v658 = vunpack.c.l.b16 %v343
      %v659 = vunpack.c.l.b16 %v344
      %v660 = vunpack.c.h.b16 %v344
      %v661 = vunpack.c.l.b16 %v345
      %v662 = vunpack.c.l.b16 %v346
      %v663 = vunpack.c.h.b16 %v346
      %v664 = vunpack.c.l.b16 %v347
      %v665 = vunpack.c.l.b16 %v348
      %v666 = vunpack.c.h.b16 %v348
      %v667 = vunpack.c.l.b16 %v349
      %v668 = vunpack.c.l.b16 %v350
      %v669 = vunpack.c.h.b16 %v350
      %v670 = vunpack.c.l.b16 %v351
      %v671 = vunpack.c.l.b16 %v352
      %v672 = vunpack.c.h.b16 %v352
      %v673 = vunpack.c.l.b16 %v353
      %v674 = vunpack.c.l.b16 %v354
      %v675 = vunpack.c.h.b16 %v354
      %v676 = vunpack.c.l.b16 %v355
      %v677 = vunpack.c.l.b16 %v356
      %v678 = vunpack.c.h.b16 %v356
      %v679 = vunpack.c.l.b16 %v357
      %v680 = vunpack.c.l.b16 %v358
      %v681 = vunpack.c.h.b16 %v358
      %v682 = vunpack.c.l.b16 %v359
      %v683 = vpack.c.b16 %v638, %v635
      %v684 = vpack.c.b16 %v639, %v636
      %v685 = vpack.c.b16 %v640, %v637
      %v686 = vpack.c.b16 %v644, %v641
      %v687 = vpack.c.b16 %v645, %v642
      %v688 = vpack.c.b16 %v646, %v643
      %v689 = vpack.c.b16 %v650, %v647
      %v690 = vpack.c.b16 %v651, %v648
      %v691 = vpack.c.b16 %v652, %v649
      %v692 = vpack.c.b16 %v656, %v653
      %v693 = vpack.c.b16 %v657, %v654
      %v694 = vpack.c.b16 %v658, %v655
      %v695 = vpack.c.b16 %v662, %v659
      %v696 = vpack.c.b16 %v663, %v660
      %v697 = vpack.c.b16 %v664, %v661
      %v698 = vpack.c.b16 %v668, %v665
      %v699 = vpack.c.b16 %v669, %v666
      %v700 = vpack.c.b16 %v670, %v667
      %v701 = vpack.c.b16 %v674, %v671
      %v702 = vpack.c.b16 %v675, %v672
      %v703 = vpack.c.b16 %v676, %v673
      %v704 = vpack.c.b16 %v680, %v677
      %v705 = vpack.c.b16 %v681, %v678
      %v706 = vpack.c.b16 %v682, %v679
      %731 = vmatprep.subr.bf16.mxu0 %v684
      %732 = vmatpush1.bf16.msra.mxu0 %v683
      %733 = vmatprep.subr.bf16.mxu0 %v687
      %734 = vmatpush1.bf16.msra.mxu0 %v686
      %735 = vmatprep.subr.bf16.mxu0 %v690
      %736 = vmatpush1.bf16.msra.mxu0 %v689
      %737 = vmatprep.subr.bf16.mxu0 %v693
      %738 = vmatpush1.bf16.msra.mxu0 %v692
      %739 = vmatprep.subr.bf16.mxu0 %v696
      %740 = vmatpush1.bf16.msra.mxu0 %v695
      %741 = vmatprep.subr.bf16.mxu0 %v699
      %742 = vmatpush1.bf16.msra.mxu0 %v698
      %743 = vmatprep.subr.bf16.mxu0 %v702
      %744 = vmatpush1.bf16.msra.mxu0 %v701
      %745 = vmatprep.subr.bf16.mxu0 %v705
      %746 = vmatpush1.bf16.msra.mxu0 %v704
      %747 = vmatprep.subr.bf16.mxu0 0
      %748 = vmatpush1.bf16.msra.mxu0 0
      %749 = vmatprep.subr.bf16.mxu0 0
      %750 = vmatpush1.bf16.msra.mxu0 0
      %751 = vmatprep.subr.bf16.mxu0 0
      %752 = vmatpush1.bf16.msra.mxu0 0
      %753 = vmatprep.subr.bf16.mxu0 0
      %754 = vmatpush1.bf16.msra.mxu0 0
      %755 = vmatprep.subr.bf16.mxu0 0
      %756 = vmatpush1.bf16.msra.mxu0 0
      %757 = vmatprep.subr.bf16.mxu0 0
      %758 = vmatpush1.bf16.msra.mxu0 0
      %759 = vmatprep.subr.bf16.mxu0 0
      %760 = vmatpush1.bf16.msra.mxu0 0
      %761 = vmatprep.subr.bf16.mxu0 0
      %762 = vmatpush1.bf16.msra.mxu0 0
      %763 = vmatprep.mubr.bf16.mxu0 0
      %764 = vmatmul.mubr.bf16.gmra.mrb[0].mxu0 0
      %v765 = vpop.f32.mrb[0].mxu0
      %v766 = vadd.f32 %v591, %v765
      %v767 = vpop.f32.mrb[0].mxu0
      %v768 = vadd.f32 %v595, %v767
      %v769 = vpop.f32.mrb[0].mxu0
      %v770 = vpop.f32.mrb[0].mxu0
      %771 = vdwg.mxu0
      %772 = vmatprep.subr.bf16.mxu0 0
      %773 = vmatpush1.bf16.msra.mxu0 %v685
      %774 = vmatprep.subr.bf16.mxu0 0
      %775 = vmatpush1.bf16.msra.mxu0 %v688
      %776 = vmatprep.subr.bf16.mxu0 0
      %777 = vmatpush1.bf16.msra.mxu0 %v691
      %778 = vmatprep.subr.bf16.mxu0 0
      %779 = vmatpush1.bf16.msra.mxu0 %v694
      %780 = vmatprep.subr.bf16.mxu0 0
      %781 = vmatpush1.bf16.msra.mxu0 %v697
      %782 = vmatprep.subr.bf16.mxu0 0
      %783 = vmatpush1.bf16.msra.mxu0 %v700
      %784 = vmatprep.subr.bf16.mxu0 0
      %785 = vmatpush1.bf16.msra.mxu0 %v703
      %786 = vmatprep.subr.bf16.mxu0 0
      %787 = vmatpush1.bf16.msra.mxu0 %v706
      %788 = vmatprep.subr.bf16.mxu0 0
      %789 = vmatpush1.bf16.msra.mxu0 0
      %790 = vmatprep.subr.bf16.mxu0 0
      %791 = vmatpush1.bf16.msra.mxu0 0
      %792 = vmatprep.subr.bf16.mxu0 0
      %793 = vmatpush1.bf16.msra.mxu0 0
      %794 = vmatprep.subr.bf16.mxu0 0
      %795 = vmatpush1.bf16.msra.mxu0 0
      %796 = vmatprep.subr.bf16.mxu0 0
      %797 = vmatpush1.bf16.msra.mxu0 0
      %798 = vmatprep.subr.bf16.mxu0 0
      %799 = vmatpush1.bf16.msra.mxu0 0
      %800 = vmatprep.subr.bf16.mxu0 0
      %801 = vmatpush1.bf16.msra.mxu0 0
      %802 = vmatprep.subr.bf16.mxu0 0
      %803 = vmatpush1.bf16.msra.mxu0 0
      %804 = vmatprep.mubr.bf16.mxu0 0
      %805 = vmatmul.mubr.bf16.gmra.mrb[0].mxu0 0
      %v806 = vpop.f32.mrb[0].mxu0
      %v807 = vadd.f32 %v599, %v806
      %v808 = vpop.f32.mrb[0].mxu0
      %v809 = vpop.f32.mrb[0].mxu0
      %v810 = vpop.f32.mrb[0].mxu0
      %811 = vdwg.mxu0
      %v812 = vadd.f32 %v541, %v766
      %v813 = vadd.f32 %v543, %v768
      %v814 = vxor.u32 %v812, 2147483648
      %v815 = vxor.u32 %v813, 2147483648
      %v816 = vmul.f32 %v814, 1.442695
      %v817 = vpow.pop %v816
      %v818 = vmul.f32 %v815, 1.442695
      %v819 = vpow.pop %v818
      %v820 = vadd.f32 %v817, 1.0
      %v821 = vadd.f32 %v819, 1.0
      %v822 = vrcp.pop %v820
      %v823 = vmul.f32 1.0, %v822
      %v824 = vrcp.pop %v821
      %v825 = vmul.f32 1.0, %v824
      %v826 = vmul.f32 %v823, %v807
      %v827 = vadd.f32 %v582, %v826
      %v828 = vtanh.pop %v827
      %v829 = vsub.f32 1.0, %v825
      %v830 = vmul.f32 %v829, %v828
      %v831 = vmul.f32 %v825, 0.0
      %v832 = vadd.f32 %v830, %v831
      %v833 = vadd.f32 %v832, 0.0
      %v834 = vpack.c.bf16 %v832, %v832
      %835 = vmatprep.subr.bf16.mxu0 %v684
      %836 = vmatpush1.bf16.msra.mxu0 %v683
      %837 = vmatprep.subr.bf16.mxu0 %v687
      %838 = vmatpush1.bf16.msra.mxu0 %v686
      %839 = vmatprep.subr.bf16.mxu0 %v690
      %840 = vmatpush1.bf16.msra.mxu0 %v689
      %841 = vmatprep.subr.bf16.mxu0 %v693
      %842 = vmatpush1.bf16.msra.mxu0 %v692
      %843 = vmatprep.subr.bf16.mxu0 %v696
      %844 = vmatpush1.bf16.msra.mxu0 %v695
      %845 = vmatprep.subr.bf16.mxu0 %v699
      %846 = vmatpush1.bf16.msra.mxu0 %v698
      %847 = vmatprep.subr.bf16.mxu0 %v702
      %848 = vmatpush1.bf16.msra.mxu0 %v701
      %849 = vmatprep.subr.bf16.mxu0 %v705
      %850 = vmatpush1.bf16.msra.mxu0 %v704
      %851 = vmatprep.subr.bf16.mxu0 0
      %852 = vmatpush1.bf16.msra.mxu0 0
      %853 = vmatprep.subr.bf16.mxu0 0
      %854 = vmatpush1.bf16.msra.mxu0 0
      %855 = vmatprep.subr.bf16.mxu0 0
      %856 = vmatpush1.bf16.msra.mxu0 0
      %857 = vmatprep.subr.bf16.mxu0 0
      %858 = vmatpush1.bf16.msra.mxu0 0
      %859 = vmatprep.subr.bf16.mxu0 0
      %860 = vmatpush1.bf16.msra.mxu0 0
      %861 = vmatprep.subr.bf16.mxu0 0
      %862 = vmatpush1.bf16.msra.mxu0 0
      %863 = vmatprep.subr.bf16.mxu0 0
      %864 = vmatpush1.bf16.msra.mxu0 0
      %865 = vmatprep.subr.bf16.mxu0 0
      %866 = vmatpush1.bf16.msra.mxu0 0
      %867 = vmatprep.mubr.bf16.mxu0 0
      %868 = vmatmul.mubr.bf16.gmra.mrb[0].mxu0 %v834
      %v869 = vpop.f32.mrb[0].mxu0
      %v870 = vadd.f32 %v591, %v869
      %v871 = vpop.f32.mrb[0].mxu0
      %v872 = vadd.f32 %v595, %v871
      %v873 = vpop.f32.mrb[0].mxu0
      %v874 = vpop.f32.mrb[0].mxu0
      %875 = vdwg.mxu0
      %876 = vmatprep.subr.bf16.mxu0 0
      %877 = vmatpush1.bf16.msra.mxu0 %v685
      %878 = vmatprep.subr.bf16.mxu0 0
      %879 = vmatpush1.bf16.msra.mxu0 %v688
      %880 = vmatprep.subr.bf16.mxu0 0
      %881 = vmatpush1.bf16.msra.mxu0 %v691
      %882 = vmatprep.subr.bf16.mxu0 0
      %883 = vmatpush1.bf16.msra.mxu0 %v694
      %884 = vmatprep.subr.bf16.mxu0 0
      %885 = vmatpush1.bf16.msra.mxu0 %v697
      %886 = vmatprep.subr.bf16.mxu0 0
      %887 = vmatpush1.bf16.msra.mxu0 %v700
      %888 = vmatprep.subr.bf16.mxu0 0
      %889 = vmatpush1.bf16.msra.mxu0 %v703
      %890 = vmatprep.subr.bf16.mxu0 0
      %891 = vmatpush1.bf16.msra.mxu0 %v706
      %892 = vmatprep.subr.bf16.mxu0 0
      %893 = vmatpush1.bf16.msra.mxu0 0
      %894 = vmatprep.subr.bf16.mxu0 0
      %895 = vmatpush1.bf16.msra.mxu0 0
      %896 = vmatprep.subr.bf16.mxu0 0
      %897 = vmatpush1.bf16.msra.mxu0 0
      %898 = vmatprep.subr.bf16.mxu0 0
      %899 = vmatpush1.bf16.msra.mxu0 0
      %900 = vmatprep.subr.bf16.mxu0 0
      %901 = vmatpush1.bf16.msra.mxu0 0
      %902 = vmatprep.subr.bf16.mxu0 0
      %903 = vmatpush1.bf16.msra.mxu0 0
      %904 = vmatprep.subr.bf16.mxu0 0
      %905 = vmatpush1.bf16.msra.mxu0 0
      %906 = vmatprep.subr.bf16.mxu0 0
      %907 = vmatpush1.bf16.msra.mxu0 0
      %908 = vmatprep.mubr.bf16.mxu0 0
      %909 = vmatmul.mubr.bf16.gmra.mrb[0].mxu0 %v834
      %v910 = vpop.f32.mrb[0].mxu0
      %v911 = vadd.f32 %v599, %v910
      %v912 = vpop.f32.mrb[0].mxu0
      %v913 = vpop.f32.mrb[0].mxu0
      %v914 = vpop.f32.mrb[0].mxu0
      %915 = vdwg.mxu0
      %v918 = vrot.slane %v870, 6
      %v919 = vrot.slane %v872, 6
      %v922 = vadd.f32 %v541, %v918
      %v923 = vadd.f32 %v543, %v919
      %v924 = vxor.u32 %v922, 2147483648
      %v925 = vxor.u32 %v923, 2147483648
      %v926 = vmul.f32 %v924, 1.442695
      %v927 = vpow.pop %v926
      %v928 = vmul.f32 %v925, 1.442695
      %v929 = vpow.pop %v928
      %v930 = vadd.f32 %v927, 1.0
      %v931 = vadd.f32 %v929, 1.0
      %v932 = vrcp.pop %v930
      %v933 = vmul.f32 1.0, %v932
      %v934 = vrcp.pop %v931
      %v935 = vmul.f32 1.0, %v934
      %v937 = vrot.slane %v911, 6
      %v939 = vmul.f32 %v933, %v937
      %v940 = vadd.f32 %v582, %v939
      %v941 = vtanh.pop %v940
      %v942 = vsub.f32 1.0, %v935
      %v943 = vmul.f32 %v942, %v941
      %v945 = vrot.slane %v832, 6
      %v947 = vmul.f32 %v935, %v945
      %v948 = vadd.f32 %v943, %v947
      %v950 = vrot.slane %v948, 2
      %v952 = vadd.f32 %v833, %v950
      %v953 = vpack.c.bf16 %v948, %v948
      %v955 = vrot.slane %v953, 1
      %957 = vmatprep.subr.bf16.mxu0 %v684
      %958 = vmatpush1.bf16.msra.mxu0 %v683
      %959 = vmatprep.subr.bf16.mxu0 %v687
      %960 = vmatpush1.bf16.msra.mxu0 %v686
      %961 = vmatprep.subr.bf16.mxu0 %v690
      %962 = vmatpush1.bf16.msra.mxu0 %v689
      %963 = vmatprep.subr.bf16.mxu0 %v693
      %964 = vmatpush1.bf16.msra.mxu0 %v692
      %965 = vmatprep.subr.bf16.mxu0 %v696
      %966 = vmatpush1.bf16.msra.mxu0 %v695
      %967 = vmatprep.subr.bf16.mxu0 %v699
      %968 = vmatpush1.bf16.msra.mxu0 %v698
      %969 = vmatprep.subr.bf16.mxu0 %v702
      %970 = vmatpush1.bf16.msra.mxu0 %v701
      %971 = vmatprep.subr.bf16.mxu0 %v705
      %972 = vmatpush1.bf16.msra.mxu0 %v704
      %973 = vmatprep.subr.bf16.mxu0 0
      %974 = vmatpush1.bf16.msra.mxu0 0
      %975 = vmatprep.subr.bf16.mxu0 0
      %976 = vmatpush1.bf16.msra.mxu0 0
      %977 = vmatprep.subr.bf16.mxu0 0
      %978 = vmatpush1.bf16.msra.mxu0 0
      %979 = vmatprep.subr.bf16.mxu0 0
      %980 = vmatpush1.bf16.msra.mxu0 0
      %981 = vmatprep.subr.bf16.mxu0 0
      %982 = vmatpush1.bf16.msra.mxu0 0
      %983 = vmatprep.subr.bf16.mxu0 0
      %984 = vmatpush1.bf16.msra.mxu0 0
      %985 = vmatprep.subr.bf16.mxu0 0
      %986 = vmatpush1.bf16.msra.mxu0 0
      %987 = vmatprep.subr.bf16.mxu0 0
      %988 = vmatpush1.bf16.msra.mxu0 0
      %989 = vmatprep.mubr.bf16.mxu0 0
      %990 = vmatmul.mubr.bf16.gmra.mrb[0].mxu0 %v955
      %v991 = vpop.f32.mrb[0].mxu0
      %v992 = vadd.f32 %v591, %v991
      %v993 = vpop.f32.mrb[0].mxu0
      %v994 = vadd.f32 %v595, %v993
      %v995 = vpop.f32.mrb[0].mxu0
      %v996 = vpop.f32.mrb[0].mxu0
      %997 = vdwg.mxu0
      %998 = vmatprep.subr.bf16.mxu0 0
      %999 = vmatpush1.bf16.msra.mxu0 %v685
      %1000 = vmatprep.subr.bf16.mxu0 0
      %1001 = vmatpush1.bf16.msra.mxu0 %v688
      %1002 = vmatprep.subr.bf16.mxu0 0
      %1003 = vmatpush1.bf16.msra.mxu0 %v691
      %1004 = vmatprep.subr.bf16.mxu0 0
      %1005 = vmatpush1.bf16.msra.mxu0 %v694
      %1006 = vmatprep.subr.bf16.mxu0 0
      %1007 = vmatpush1.bf16.msra.mxu0 %v697
      %1008 = vmatprep.subr.bf16.mxu0 0
      %1009 = vmatpush1.bf16.msra.mxu0 %v700
      %1010 = vmatprep.subr.bf16.mxu0 0
      %1011 = vmatpush1.bf16.msra.mxu0 %v703
      %1012 = vmatprep.subr.bf16.mxu0 0
      %1013 = vmatpush1.bf16.msra.mxu0 %v706
      %1014 = vmatprep.subr.bf16.mxu0 0
      %1015 = vmatpush1.bf16.msra.mxu0 0
      %1016 = vmatprep.subr.bf16.mxu0 0
      %1017 = vmatpush1.bf16.msra.mxu0 0
      %1018 = vmatprep.subr.bf16.mxu0 0
      %1019 = vmatpush1.bf16.msra.mxu0 0
      %1020 = vmatprep.subr.bf16.mxu0 0
      %1021 = vmatpush1.bf16.msra.mxu0 0
      %1022 = vmatprep.subr.bf16.mxu0 0
      %1023 = vmatpush1.bf16.msra.mxu0 0
      %1024 = vmatprep.subr.bf16.mxu0 0
      %1025 = vmatpush1.bf16.msra.mxu0 0
      %1026 = vmatprep.subr.bf16.mxu0 0
      %1027 = vmatpush1.bf16.msra.mxu0 0
      %1028 = vmatprep.subr.bf16.mxu0 0
      %1029 = vmatpush1.bf16.msra.mxu0 0
      %1030 = vmatprep.mubr.bf16.mxu0 0
      %1031 = vmatmul.mubr.bf16.gmra.mrb[0].mxu0 %v955
      %v1032 = vpop.f32.mrb[0].mxu0
      %v1033 = vadd.f32 %v599, %v1032
      %v1034 = vpop.f32.mrb[0].mxu0
      %v1035 = vpop.f32.mrb[0].mxu0
      %v1036 = vpop.f32.mrb[0].mxu0
      %1037 = vdwg.mxu0
      %v1040 = vrot.slane %v992, 4
      %v1041 = vrot.slane %v994, 4
      %v1044 = vadd.f32 %v541, %v1040
      %v1045 = vadd.f32 %v543, %v1041
      %v1046 = vxor.u32 %v1044, 2147483648
      %v1047 = vxor.u32 %v1045, 2147483648
      %v1048 = vmul.f32 %v1046, 1.442695
      %v1049 = vpow.pop %v1048
      %v1050 = vmul.f32 %v1047, 1.442695
      %v1051 = vpow.pop %v1050
      %v1052 = vadd.f32 %v1049, 1.0
      %v1053 = vadd.f32 %v1051, 1.0
      %v1054 = vrcp.pop %v1052
      %v1055 = vmul.f32 1.0, %v1054
      %v1056 = vrcp.pop %v1053
      %v1057 = vmul.f32 1.0, %v1056
      %v1059 = vrot.slane %v1033, 4
      %v1061 = vmul.f32 %v1055, %v1059
      %v1062 = vadd.f32 %v582, %v1061
      %v1063 = vtanh.pop %v1062
      %v1064 = vsub.f32 1.0, %v1057
      %v1065 = vmul.f32 %v1064, %v1063
      %v1066 = vrot.slane %v948, 6
      %v1068 = vmul.f32 %v1057, %v1066
      %v1069 = vadd.f32 %v1065, %v1068
      %v1071 = vrot.slane %v1069, 4
      %v1073 = vadd.f32 %v952, %v1071
      %v1074 = vpack.c.bf16 %v1069, %v1069
      %v1076 = vrot.slane %v1074, 2
      %1078 = vmatprep.subr.bf16.mxu0 %v684
      %1079 = vmatpush1.bf16.msra.mxu0 %v683
      %1080 = vmatprep.subr.bf16.mxu0 %v687
      %1081 = vmatpush1.bf16.msra.mxu0 %v686
      %1082 = vmatprep.subr.bf16.mxu0 %v690
      %1083 = vmatpush1.bf16.msra.mxu0 %v689
      %1084 = vmatprep.subr.bf16.mxu0 %v693
      %1085 = vmatpush1.bf16.msra.mxu0 %v692
      %1086 = vmatprep.subr.bf16.mxu0 %v696
      %1087 = vmatpush1.bf16.msra.mxu0 %v695
      %1088 = vmatprep.subr.bf16.mxu0 %v699
      %1089 = vmatpush1.bf16.msra.mxu0 %v698
      %1090 = vmatprep.subr.bf16.mxu0 %v702
      %1091 = vmatpush1.bf16.msra.mxu0 %v701
      %1092 = vmatprep.subr.bf16.mxu0 %v705
      %1093 = vmatpush1.bf16.msra.mxu0 %v704
      %1094 = vmatprep.subr.bf16.mxu0 0
      %1095 = vmatpush1.bf16.msra.mxu0 0
      %1096 = vmatprep.subr.bf16.mxu0 0
      %1097 = vmatpush1.bf16.msra.mxu0 0
      %1098 = vmatprep.subr.bf16.mxu0 0
      %1099 = vmatpush1.bf16.msra.mxu0 0
      %1100 = vmatprep.subr.bf16.mxu0 0
      %1101 = vmatpush1.bf16.msra.mxu0 0
      %1102 = vmatprep.subr.bf16.mxu0 0
      %1103 = vmatpush1.bf16.msra.mxu0 0
      %1104 = vmatprep.subr.bf16.mxu0 0
      %1105 = vmatpush1.bf16.msra.mxu0 0
      %1106 = vmatprep.subr.bf16.mxu0 0
      %1107 = vmatpush1.bf16.msra.mxu0 0
      %1108 = vmatprep.subr.bf16.mxu0 0
      %1109 = vmatpush1.bf16.msra.mxu0 0
      %1110 = vmatprep.mubr.bf16.mxu0 0
      %1111 = vmatmul.mubr.bf16.gmra.mrb[0].mxu0 %v1076
      %v1112 = vpop.f32.mrb[0].mxu0
      %v1113 = vadd.f32 %v591, %v1112
      %v1114 = vpop.f32.mrb[0].mxu0
      %v1115 = vadd.f32 %v595, %v1114
      %v1116 = vpop.f32.mrb[0].mxu0
      %v1117 = vpop.f32.mrb[0].mxu0
      %1118 = vdwg.mxu0
      %1119 = vmatprep.subr.bf16.mxu0 0
      %1120 = vmatpush1.bf16.msra.mxu0 %v685
      %1121 = vmatprep.subr.bf16.mxu0 0
      %1122 = vmatpush1.bf16.msra.mxu0 %v688
      %1123 = vmatprep.subr.bf16.mxu0 0
      %1124 = vmatpush1.bf16.msra.mxu0 %v691
      %1125 = vmatprep.subr.bf16.mxu0 0
      %1126 = vmatpush1.bf16.msra.mxu0 %v694
      %1127 = vmatprep.subr.bf16.mxu0 0
      %1128 = vmatpush1.bf16.msra.mxu0 %v697
      %1129 = vmatprep.subr.bf16.mxu0 0
      %1130 = vmatpush1.bf16.msra.mxu0 %v700
      %1131 = vmatprep.subr.bf16.mxu0 0
      %1132 = vmatpush1.bf16.msra.mxu0 %v703
      %1133 = vmatprep.subr.bf16.mxu0 0
      %1134 = vmatpush1.bf16.msra.mxu0 %v706
      %1135 = vmatprep.subr.bf16.mxu0 0
      %1136 = vmatpush1.bf16.msra.mxu0 0
      %1137 = vmatprep.subr.bf16.mxu0 0
      %1138 = vmatpush1.bf16.msra.mxu0 0
      %1139 = vmatprep.subr.bf16.mxu0 0
      %1140 = vmatpush1.bf16.msra.mxu0 0
      %1141 = vmatprep.subr.bf16.mxu0 0
      %1142 = vmatpush1.bf16.msra.mxu0 0
      %1143 = vmatprep.subr.bf16.mxu0 0
      %1144 = vmatpush1.bf16.msra.mxu0 0
      %1145 = vmatprep.subr.bf16.mxu0 0
      %1146 = vmatpush1.bf16.msra.mxu0 0
      %1147 = vmatprep.subr.bf16.mxu0 0
      %1148 = vmatpush1.bf16.msra.mxu0 0
      %1149 = vmatprep.subr.bf16.mxu0 0
      %1150 = vmatpush1.bf16.msra.mxu0 0
      %1151 = vmatprep.mubr.bf16.mxu0 0
      %1152 = vmatmul.mubr.bf16.gmra.mrb[0].mxu0 %v1076
      %v1153 = vpop.f32.mrb[0].mxu0
      %v1154 = vadd.f32 %v599, %v1153
      %v1155 = vpop.f32.mrb[0].mxu0
      %v1156 = vpop.f32.mrb[0].mxu0
      %v1157 = vpop.f32.mrb[0].mxu0
      %1158 = vdwg.mxu0
      %v1161 = vrot.slane %v1113, 2
      %v1162 = vrot.slane %v1115, 2
      %v1165 = vadd.f32 %v541, %v1161
      %v1166 = vadd.f32 %v543, %v1162
      %v1167 = vxor.u32 %v1165, 2147483648
      %v1168 = vxor.u32 %v1166, 2147483648
      %v1169 = vmul.f32 %v1167, 1.442695
      %v1170 = vpow.pop %v1169
      %v1171 = vmul.f32 %v1168, 1.442695
      %v1172 = vpow.pop %v1171
      %v1173 = vadd.f32 %v1170, 1.0
      %v1174 = vadd.f32 %v1172, 1.0
      %v1175 = vrcp.pop %v1173
      %v1176 = vmul.f32 1.0, %v1175
      %v1177 = vrcp.pop %v1174
      %v1178 = vmul.f32 1.0, %v1177
      %v1180 = vrot.slane %v1154, 2
      %v1182 = vmul.f32 %v1176, %v1180
      %v1183 = vadd.f32 %v582, %v1182
      %v1184 = vtanh.pop %v1183
      %v1185 = vsub.f32 1.0, %v1178
      %v1186 = vmul.f32 %v1185, %v1184
      %v1187 = vrot.slane %v1069, 6
      %v1189 = vmul.f32 %v1178, %v1187
      %v1190 = vadd.f32 %v1186, %v1189
      %v1192 = vrot.slane %v1190, 6
      %v1194 = vadd.f32 %v1073, %v1192
      %v1195 = vmul.f32 %v1194, 0.25
      %1196 = vst [vmem:[%s293] sm:$0x3] %v1195
      %p1197 = scmp.lt.s32.totalorder %s16, 1
      %s1198 = scalar_select %p1197, %s16, 1
      %s1199 = smul.addr %s1198, 2
      %s1200 = scalar_lea.vmem %s5, %s1199
      // Predicated region
      $region41: #{feature_extraction_forward.5} parent=39 // pred_check
        %p1201 = pneg %p164
      $region42: #{feature_extraction_forward.5} parent=39 // pred_check_branch
        %1203 = sbr.rel (%p1201) target = $region44
      $region43: #{feature_extraction_forward.5} parent=39 // pred_region
        _
      $region44: #{feature_extraction_forward.5} parent=39 // pred_fallthru
        _
    $region40: #{feature_extraction_forward.5} parent=5 // pred_fallthru
      _
    %p1204 = scmp.le.s32.totalorder 2, %s11
    // Predicated region
    $region45: #{feature_extraction_forward.5} parent=5 // pred_check
      %p1205 = pneg %p1204
    $region46: #{feature_extraction_forward.5} parent=5 // pred_check_branch
      %1207 = sbr.rel (%p1205) target = $region48
    $region47: #{feature_extraction_forward.5} parent=5 // pred_region
      %s1208 = ssub.s32 %s11, 2
      // Predicated region
      $region49: #{feature_extraction_forward.5} parent=47 // pred_check
        %p1209 = pneg %p170
      $region50: #{feature_extraction_forward.5} parent=47 // pred_check_branch
        %1211 = sbr.rel (%p1209) target = $region52
      $region51: #{feature_extraction_forward.5} parent=47 // pred_region
        %p1212 = scmp.lt.s32.totalorder %s17, 1
        %s1213 = scalar_select %p1212, %s17, 1
        %s1214 = smul.addr %s1213, 2
        %s1215 = scalar_lea.vmem %s5, %s1214
      $region52: #{feature_extraction_forward.5} parent=47 // pred_fallthru
        _
    $region48: #{feature_extraction_forward.5} parent=5 // pred_fallthru
      _
  $region6: #{feature_extraction_forward.5} parent=0 // loop_footer
    %s15 = sadd.s32 1, %s11
  $region7: #{feature_extraction_forward.5} parent=0 // loop_footer_branch
    %10 = sbr.rel target = $region3
  $region8: #{feature_extraction_forward.5} parent=0 // loop_exit
    _

</llo_original>
